<compile_context>
chip_gen: v6e
topology: v6e:2x2x1
jax: 0.10.0
libtpu: 0.0.40
codegen_flags: <defaults>
</compile_context>

<pallas_src>
import jax
import jax.numpy as jnp
from jax.experimental import pallas as pl
from jax.experimental.pallas import tpu as pltpu


def soft_attention_kernel(h_ref, ctx_ref, bias_ref, w_in_ref, w_out_ref,
                          h_tilde_ref, attn_ref, cat_ref):
    h = h_ref[...]                                   # (Bt, Q)    compute dtype
    ctx = ctx_ref[...]                               # (Bt, S, C) compute dtype
    bias = bias_ref[...].astype(jnp.float32)         # (Bt, S)    additive mask bias
    w_in = w_in_ref[...]                             # (Q, C)   = linear_in.weight.T
    w_out = w_out_ref[...]                           # (C+Q, Q) = linear_out.weight.T
    C = ctx.shape[-1]

    # target = linear_in(h) -> (Bt, C)                              [MXU, f32 acc]
    target = jnp.dot(h, w_in, preferred_element_type=jnp.float32)

    # attn logits = bmm(ctx, target.unsqueeze(2)).squeeze(2) -> (Bt, S)   [MXU]
    scores = jnp.einsum('bqc,bsc->bqs',
                        target.astype(ctx.dtype)[:, None, :], ctx,
                        preferred_element_type=jnp.float32)[:, 0, :]
    scores = scores + bias                            # masked positions -> ~-1e30

    # softmax over the sequence axis in f32; reciprocal on the EUP slot.
    m = jnp.max(scores, axis=-1, keepdims=True)
    e = jnp.exp(scores - m)
    inv = pl.reciprocal(jnp.sum(e, axis=-1, keepdims=True), approx=True)
    attn = e * inv                                    # (Bt, S) f32
    attn_ref[...] = attn.astype(attn_ref.dtype)

    # weighted_context = bmm(attn3, ctx).squeeze(1) -> (Bt, C)             [MXU]
    wctx = jnp.einsum('bqs,bsc->bqc',
                      attn.astype(ctx.dtype)[:, None, :], ctx,
                      preferred_element_type=jnp.float32)[:, 0, :]

    # h_tilde = tanh(cat([wctx, h], 1) @ W_out.T): single MXU pass with K = C+Q.
    cat_ref[:, :C] = wctx.astype(cat_ref.dtype)
    cat_ref[:, C:] = h
    h_tilde = jnp.tanh(jnp.dot(cat_ref[...], w_out,
                               preferred_element_type=jnp.float32))
    h_tilde_ref[...] = h_tilde.astype(h_tilde_ref.dtype)


def _choose_block_b(B, S, C, Q, itemsize, budget_bytes):
    """Largest batch tile (multiple of 8, divides B) whose double-buffered
    footprint stays under a conservative VMEM budget."""
    for bt in (256, 128, 64, 32, 16, 8):
        if bt > B or B % bt:
            continue
        tile = 2 * bt * S * C * itemsize                 # context (x2 buffers)
        tile += 2 * bt * (Q + S) * itemsize              # h + bias
        tile += 2 * bt * (Q + S) * 4                     # f32 outputs
        tile += 2 * (Q * C + (C + Q) * Q) * itemsize     # weights
        tile += bt * (C + Q) * itemsize                  # concat scratch
        if tile <= budget_bytes:
            return bt
    return B                                             # tiny/awkward batch: one tile


def soft_attention(h, context, mask, w_in, w_out, *,
                   compute_dtype=jnp.bfloat16, block_b=None,
                   vmem_budget_bytes=12 * 2**20):
    """h: (B,Q) f32; context: (B,S,C) f32; mask: (B,S) bool (True = masked out);
    w_in: (C,Q) = linear_in.weight; w_out: (Q, C+Q) = linear_out[0].weight."""
    B, Q = h.shape
    _, S, C = context.shape
    itemsize = jnp.dtype(compute_dtype).itemsize

    if block_b is None:
        block_b = _choose_block_b(B, S, C, Q, itemsize, vmem_budget_bytes)
    if B % block_b:
        block_b = B
    grid = (B // block_b,)

    # Glue done once outside the kernel: transpose/cast weights, mask -> bias.
    h_dt = h.astype(compute_dtype)
    ctx_dt = context.astype(compute_dtype)
    w_in_t = jnp.transpose(w_in).astype(compute_dtype)        # (Q, C)
    w_out_t = jnp.transpose(w_out).astype(compute_dtype)      # (C+Q, Q)
    bias = jnp.where(mask, -1e30, 0.0).astype(compute_dtype)  # (B, S)

    # Rough per-step VMEM footprint -> explicit scoped-VMEM limit with headroom.
    tile_est = ((2 * block_b * S * C + 2 * block_b * (Q + S)
                 + 2 * (Q * C + (C + Q) * Q) + block_b * (C + Q)) * itemsize
                + 2 * block_b * (Q + S) * 4)
    vmem_limit = int(min(max(4 * tile_est, 32 * 2**20), 48 * 2**20))

    h_tilde, attn = pl.pallas_call(
        soft_attention_kernel,
        out_shape=(jax.ShapeDtypeStruct((B, Q), jnp.float32),
                   jax.ShapeDtypeStruct((B, S), jnp.float32)),
        grid_spec=pltpu.PrefetchScalarGridSpec(
            num_scalar_prefetch=0,
            grid=grid,
            in_specs=[
                pl.BlockSpec((block_b, Q), lambda b: (b, 0)),        # h
                pl.BlockSpec((block_b, S, C), lambda b: (b, 0, 0)),  # context
                pl.BlockSpec((block_b, S), lambda b: (b, 0)),        # mask bias
                pl.BlockSpec((Q, C), lambda b: (0, 0)),              # W_in.T
                pl.BlockSpec((C + Q, Q), lambda b: (0, 0)),          # W_out.T
            ],
            out_specs=(
                pl.BlockSpec((block_b, Q), lambda b: (b, 0)),        # h_tilde
                pl.BlockSpec((block_b, S), lambda b: (b, 0)),        # attn
            ),
            scratch_shapes=[pltpu.VMEM((block_b, C + Q), compute_dtype)],
        ),
        compiler_params=pltpu.CompilerParams(
            dimension_semantics=("parallel",),
            vmem_limit_bytes=vmem_limit),
    )(h_dt, ctx_dt, bias, w_in_t, w_out_t)
    return h_tilde, attn


def soft_attention_ref(h, context, mask, w_in, w_out):
    """Pure-JAX f32 reference mirroring the PyTorch module."""
    target = h @ w_in.T
    attn = jnp.einsum('bsc,bc->bs', context, target)
    attn = jnp.where(mask, -jnp.inf, attn)
    attn = jax.nn.softmax(attn, axis=-1)
    wctx = jnp.einsum('bs,bsc->bc', attn, context)
    h_tilde = jnp.tanh(jnp.concatenate([wctx, h], axis=1) @ w_out.T)
    return h_tilde, attn


if __name__ == "__main__":
    B, S, Q, C = 32, 8, 32, 64   # batch, seq_len, query_dim, ctx_dim
    key = jax.random.PRNGKey(0)
    k_h, k_ctx, k_m, k_win, k_wout = jax.random.split(key, 5)

    h = jax.random.normal(k_h, (B, Q), dtype=jnp.float32)
    context = jax.random.normal(k_ctx, (B, S, C), dtype=jnp.float32)
    mask = jax.random.bernoulli(k_m, 0.25, (B, S))
    mask = mask.at[:, 0].set(False)   # keep at least one unmasked position per row

    # nn.Linear weight shapes: linear_in.weight (C, Q); linear_out[0].weight (Q, C+Q)
    w_in = 0.1 * jax.random.normal(k_win, (C, Q), dtype=jnp.float32)
    w_out = 0.1 * jax.random.normal(k_wout, (Q, Q + C), dtype=jnp.float32)

    ht_ref, attn_ref = soft_attention_ref(h, context, mask, w_in, w_out)

    # f32 compute path (tight check; block_b=8 exercises a 4-step batch grid).
    ht32, at32 = soft_attention(h, context, mask, w_in, w_out,
                                compute_dtype=jnp.float32, block_b=8)
    jax.block_until_ready((ht32, at32))
    assert jnp.allclose(ht32, ht_ref, atol=5e-3, rtol=5e-3)
    assert jnp.allclose(at32, attn_ref, atol=5e-3, rtol=5e-3)

    # bf16 compute path (default perf config on v6e/v7x; looser tolerance).
    ht16, at16 = soft_attention(h, context, mask, w_in, w_out, block_b=8)
    jax.block_until_ready((ht16, at16))
    assert jnp.allclose(ht16, ht_ref, atol=1e-1, rtol=1e-1)
    assert jnp.allclose(at16, attn_ref, atol=1e-1, rtol=1e-1)

    print("KERNEL_OK")
</pallas_src>

<mosaic_0001>
module attributes {stable_mosaic.version = 11 : i64} {
  func.func @soft_attention_kernel(%arg0: i32, %arg1: memref<8x32xf32, #tpu.memory_space<vmem>>, %arg2: memref<8x8x64xf32, #tpu.memory_space<vmem>>, %arg3: memref<8x8xf32, #tpu.memory_space<vmem>>, %arg4: memref<32x64xf32, #tpu.memory_space<vmem>>, %arg5: memref<96x32xf32, #tpu.memory_space<vmem>>, %arg6: memref<8x32xf32, #tpu.memory_space<vmem>>, %arg7: memref<8x8xf32, #tpu.memory_space<vmem>>, %arg8: memref<8x96xf32, #tpu.memory_space<vmem>>) attributes {dimension_semantics = [#tpu.dimension_semantics<parallel>], iteration_bounds = array<i64: 4>, scalar_prefetch = 0 : i64, scratch_operands = 1 : i64, tpu.core_type = #tpu.core_type<tc>, window_params = [{transform_indices = @transform_0, window_bounds = array<i64: 8, 32>}, {transform_indices = @transform_1, window_bounds = array<i64: 8, 8, 64>}, {transform_indices = @transform_2, window_bounds = array<i64: 8, 8>}, {pipeline_mode = #tpu.pipeline_mode<synchronous>, transform_indices = @transform_3, window_bounds = array<i64: 32, 64>}, {pipeline_mode = #tpu.pipeline_mode<synchronous>, transform_indices = @transform_4, window_bounds = array<i64: 96, 32>}, {transform_indices = @transform_5, window_bounds = array<i64: 8, 32>}, {transform_indices = @transform_6, window_bounds = array<i64: 8, 8>}]} {
    %c0 = arith.constant 0 : index
    %c0_0 = arith.constant 0 : index
    %0 = vector.load %arg1[%c0, %c0_0] : memref<8x32xf32, #tpu.memory_space<vmem>>, vector<8x32xf32>
    %c0_1 = arith.constant 0 : index
    %c0_2 = arith.constant 0 : index
    %c0_3 = arith.constant 0 : index
    %1 = vector.load %arg2[%c0_1, %c0_2, %c0_3] : memref<8x8x64xf32, #tpu.memory_space<vmem>>, vector<8x8x64xf32>
    %c0_4 = arith.constant 0 : index
    %c0_5 = arith.constant 0 : index
    %2 = vector.load %arg3[%c0_4, %c0_5] : memref<8x8xf32, #tpu.memory_space<vmem>>, vector<8x8xf32>
    %c0_6 = arith.constant 0 : index
    %c0_7 = arith.constant 0 : index
    %3 = vector.load %arg4[%c0_6, %c0_7] : memref<32x64xf32, #tpu.memory_space<vmem>>, vector<32x64xf32>
    %c0_8 = arith.constant 0 : index
    %c0_9 = arith.constant 0 : index
    %4 = vector.load %arg5[%c0_8, %c0_9] : memref<96x32xf32, #tpu.memory_space<vmem>>, vector<96x32xf32>
    %cst = arith.constant dense<0.000000e+00> : vector<8x64xf32>
    %5 = tpu.matmul %0, %3, %cst {dimension_numbers = #tpu.dot_dimension_numbers<[1], [0], [0], [1], [0, 0, 1, 1], [], []>} : vector<8x32xf32>, vector<32x64xf32>, vector<8x64xf32> -> vector<8x64xf32>
    %6 = vector.shape_cast %5 : vector<8x64xf32> to vector<8x1x64xf32>
    "tpu.trace_start"() <{level = 10 : i32, message = "bqc,bsc->bqs"}> : () -> ()
    %cst_10 = arith.constant dense<0.000000e+00> : vector<8x1x8xf32>
    %7 = tpu.matmul %6, %1, %cst_10 {dimension_numbers = #tpu.dot_dimension_numbers<[2], [2], [1], [1], [0, 0, 0, 1, 1, 1], [0], [0]>} : vector<8x1x64xf32>, vector<8x8x64xf32>, vector<8x1x8xf32> -> vector<8x1x8xf32>
    "tpu.trace_stop"() : () -> ()
    %8 = vector.shape_cast %7 : vector<8x1x8xf32> to vector<8x8xf32>
    %9 = arith.addf %8, %2 : vector<8x8xf32>
    %cst_11 = arith.constant dense<0xFF800000> : vector<8xf32>
    %10 = vector.multi_reduction <maximumf>, %9, %cst_11 [1] : vector<8x8xf32> to vector<8xf32>
    %11 = vector.shape_cast %10 : vector<8xf32> to vector<8x1xf32>
    %12 = vector.broadcast %11 : vector<8x1xf32> to vector<8x8xf32>
    %13 = arith.subf %9, %12 : vector<8x8xf32>
    %14 = math.exp %13 : vector<8x8xf32>
    %cst_12 = arith.constant dense<0.000000e+00> : vector<8xf32>
    %15 = vector.multi_reduction <add>, %14, %cst_12 [1] : vector<8x8xf32> to vector<8xf32>
    %16 = vector.shape_cast %15 : vector<8xf32> to vector<8x1xf32>
    %17 = tpu.reciprocal %16 {approx = true} : vector<8x1xf32> -> vector<8x1xf32>
    %18 = vector.broadcast %17 : vector<8x1xf32> to vector<8x8xf32>
    %19 = arith.mulf %14, %18 : vector<8x8xf32>
    %c0_13 = arith.constant 0 : index
    %c0_14 = arith.constant 0 : index
    %20 = vector.load %arg7[%c0_13, %c0_14] : memref<8x8xf32, #tpu.memory_space<vmem>>, vector<8x8xf32>
    tpu.vector_store %arg7[%c0_13, %c0_14], %19 {strides = array<i32>} : memref<8x8xf32, #tpu.memory_space<vmem>>, vector<8x8xf32>,
    %21 = vector.shape_cast %19 : vector<8x8xf32> to vector<8x1x8xf32>
    "tpu.trace_start"() <{level = 10 : i32, message = "bqs,bsc->bqc"}> : () -> ()
    %cst_15 = arith.constant dense<0.000000e+00> : vector<8x1x64xf32>
    %22 = tpu.matmul %21, %1, %cst_15 {dimension_numbers = #tpu.dot_dimension_numbers<[2], [1], [1], [2], [0, 0, 0, 1, 1, 2], [0], [0]>} : vector<8x1x8xf32>, vector<8x8x64xf32>, vector<8x1x64xf32> -> vector<8x1x64xf32>
    "tpu.trace_stop"() : () -> ()
    %23 = vector.shape_cast %22 : vector<8x1x64xf32> to vector<8x64xf32>
    %c0_16 = arith.constant 0 : index
    %c0_17 = arith.constant 0 : index
    %24 = vector.load %arg8[%c0_16, %c0_17] : memref<8x96xf32, #tpu.memory_space<vmem>>, vector<8x64xf32>
    tpu.vector_store %arg8[%c0_16, %c0_17], %23 {strides = array<i32>} : memref<8x96xf32, #tpu.memory_space<vmem>>, vector<8x64xf32>,
    %c0_18 = arith.constant 0 : index
    %c64 = arith.constant 64 : index
    %25 = vector.load %arg8[%c0_18, %c64] : memref<8x96xf32, #tpu.memory_space<vmem>>, vector<8x32xf32>
    tpu.vector_store %arg8[%c0_18, %c64], %0 {strides = array<i32>} : memref<8x96xf32, #tpu.memory_space<vmem>>, vector<8x32xf32>,
    %c0_19 = arith.constant 0 : index
    %c0_20 = arith.constant 0 : index
    %26 = vector.load %arg8[%c0_19, %c0_20] : memref<8x96xf32, #tpu.memory_space<vmem>>, vector<8x96xf32>
    %cst_21 = arith.constant dense<0.000000e+00> : vector<8x32xf32>
    %27 = tpu.matmul %26, %4, %cst_21 {dimension_numbers = #tpu.dot_dimension_numbers<[1], [0], [0], [1], [0, 0, 1, 1], [], []>} : vector<8x96xf32>, vector<96x32xf32>, vector<8x32xf32> -> vector<8x32xf32>
    %28 = math.tanh %27 : vector<8x32xf32>
    %c0_22 = arith.constant 0 : index
    %c0_23 = arith.constant 0 : index
    %29 = vector.load %arg6[%c0_22, %c0_23] : memref<8x32xf32, #tpu.memory_space<vmem>>, vector<8x32xf32>
    tpu.vector_store %arg6[%c0_22, %c0_23], %28 {strides = array<i32>} : memref<8x32xf32, #tpu.memory_space<vmem>>, vector<8x32xf32>,
    return
  }
  func.func @transform_0(%arg0: i32) -> (i32, i32) {
    %c0_i32 = arith.constant 0 : i32
    %c0_i32_0 = arith.constant 0 : i32
    return %arg0, %c0_i32 : i32, i32
  }
  func.func @transform_1(%arg0: i32) -> (i32, i32, i32) {
    %c0_i32 = arith.constant 0 : i32
    %c0_i32_0 = arith.constant 0 : i32
    %c0_i32_1 = arith.constant 0 : i32
    return %arg0, %c0_i32, %c0_i32_0 : i32, i32, i32
  }
  func.func @transform_2(%arg0: i32) -> (i32, i32) {
    %c0_i32 = arith.constant 0 : i32
    %c0_i32_0 = arith.constant 0 : i32
    return %arg0, %c0_i32 : i32, i32
  }
  func.func @transform_3(%arg0: i32) -> (i32, i32) {
    %c0_i32 = arith.constant 0 : i32
    %c0_i32_0 = arith.constant 0 : i32
    %c0_i32_1 = arith.constant 0 : i32
    return %c0_i32, %c0_i32_0 : i32, i32
  }
  func.func @transform_4(%arg0: i32) -> (i32, i32) {
    %c0_i32 = arith.constant 0 : i32
    %c0_i32_0 = arith.constant 0 : i32
    %c0_i32_1 = arith.constant 0 : i32
    return %c0_i32, %c0_i32_0 : i32, i32
  }
  func.func @transform_5(%arg0: i32) -> (i32, i32) {
    %c0_i32 = arith.constant 0 : i32
    %c0_i32_0 = arith.constant 0 : i32
    return %arg0, %c0_i32 : i32, i32
  }
  func.func @transform_6(%arg0: i32) -> (i32, i32) {
    %c0_i32 = arith.constant 0 : i32
    %c0_i32_0 = arith.constant 0 : i32
    return %arg0, %c0_i32 : i32, i32
  }
}

</mosaic_0001>

<llo_original>
// kernel: tpu_custom_call.1
$region0: #{tpu_custom_call.1}
  #allocation0 [shape = 'u32[]', space=smem, size = 0x4, offset = 0x4, fixed_abs, tag = 'smem constant byte address 0x4 - core index']
  #allocation1 [shape = 'u32[144,128]{1,0:T(1,128)}', space=vmem, size = 0x12000, scoped, tag = 'internal scratch']
  #allocation2 [shape = 'f32[8,96]{1,0:T(8,128)}', space=vmem, size = 0x1000, scoped, tag = 'scratch operand']
  %s0 = inlined_call_operand.vmem [shape: f32[32,32], index: 0, kind: input, shape index: {}]
  %s1 = inlined_call_operand.hbm [shape: f32[32,8,64], index: 1, kind: input, shape index: {}]
  %s2 = inlined_call_operand.vmem [shape: f32[32,8], index: 2, kind: input, shape index: {}]
  %s3 = inlined_call_operand.vmem [shape: f32[32,64], index: 3, kind: input, shape index: {}]
  %s4 = inlined_call_operand.vmem [shape: f32[96,32], index: 4, kind: input, shape index: {}]
  %s5 = inlined_call_operand.hbm [shape: f32[32,32], index: 5, kind: output, shape index: {0}]
  %s6 = inlined_call_operand.vmem [shape: f32[32,8], index: 6, kind: output, shape index: {1}]
  %7 = xla_tuple %s5, %s6
  %s8 = sld [smem:[#allocation0]]
  $region65: #{tpu_custom_call.1} parent=0
    _
  %s10 = ssub.s32 1, %s8
  %s11 = scalar_select 0, %s10, %s8
  $region1: #{tpu_custom_call.1} parent=0
    #allocation3 [shape = 'u8[65536]{0}', space=vmem, size = 0x10000, scoped, tag = 'input window, operand 1']
    #allocation4 [shape = 's32[2]{0}', space=sflag, size = 0x8, scoped, tag = 'scoped memory for tpu_custom_call.1']
    #allocation5 [shape = 's32[2]{0}', space=sflag, size = 0x8, scoped, tag = 'scoped memory for tpu_custom_call.1']
    #allocation6 [shape = 'u8[8192]{0}', space=vmem, size = 0x2000, scoped, tag = 'output window, operand 0']
    %12 = vsyncpa [#allocation4], 0
    %s13 = scalar_lea.sflag [#allocation4], 1
    %14 = vsyncpa %s13, 0
    %15 = vsyncpa [#allocation5], 0
    %s16 = scalar_lea.sflag [#allocation5], 1
    %17 = vsyncpa %s16, 0
    loop: start=0, step=1, limit=6
    $region2: #{tpu_custom_call.1} parent=1 // loop_pre_header
      _
    $region3: #{tpu_custom_call.1} parent=1 // loop_header
      %s19 = sphi 0, %s23
      %p20 = scmp.ge.s32.totalorder %s19, 6
      %s29 = sphi 0, %s31
      %s32 = sphi 0, %s29
      %s33 = sphi 0, %s32
      %s49 = sphi 0, %s33
      %s55 = sphi 0, %s57
      %s58 = sphi 0, %s55
      %s59 = sphi 0, %s58
      %s75 = sphi 0, %s59
      %s81 = sphi 0, %s83
      %s84 = sphi 0, %s81
      %s85 = sphi 0, %s84
      %s101 = sphi 0, %s85
      %s105 = sphi 0, %s105
      %s107 = sphi 0, %s105
      %s108 = sphi 0, %s107
      %s122 = sphi 0, %s108
      %s126 = sphi 0, %s126
      %s128 = sphi 0, %s126
      %s129 = sphi 0, %s128
      %s143 = sphi 0, %s129
      %s149 = sphi 0, %s151
      %s152 = sphi 0, %s149
      %s153 = sphi 0, %s152
      %s169 = sphi 0, %s153
      %s175 = sphi 0, %s177
      %s178 = sphi 0, %s175
      %s179 = sphi 0, %s178
      %s195 = sphi 0, %s179
    $region4: #{tpu_custom_call.1} parent=1 // loop_header_branch
      %22 = sbr.rel (%p20) target = $region8
    $region5: #{tpu_custom_call.1} parent=1 // loop_body
      %s24 = ssub.s32 %s19, 1
      %s25 = ssub.s32 %s19, 2
      %s26 = sadd.s32 %s19, 1
      %s27 = ssub.s32 %s19, %s26
      %p28 = scmp.eq.s32.totalorder %s27, 0
      %s30 = sadd.s32 %s29, 1
      %s31 = scalar_select %p28, %s29, %s30
      %p34 = pneg %p28
      %p35 = scmp.eq.s32.totalorder %s19, 3
      %p36 = por %p34, %p35
      %p37 = scmp.ne.s32.totalorder %s29, %s32
      %p38 = scmp.eq.s32.totalorder %s19, 0
      %p39 = por %p37, %p38
      %p40 = scmp.ne.s32.totalorder %s29, %s32
      %p41 = scmp.eq.s32.totalorder %s24, 3
      %p42 = por %p40, %p41
      %p43 = scmp.ne.s32.totalorder %s32, %s33
      %p44 = scmp.eq.s32.totalorder %s24, 0
      %p45 = por %p43, %p44
      %p46 = scmp.ne.s32.totalorder %s32, %s33
      %p47 = scmp.eq.s32.totalorder %s25, 3
      %p48 = por %p46, %p47
      %p50 = scmp.ne.s32.totalorder %s33, %s49
      %p51 = scmp.eq.s32.totalorder %s25, 0
      %p52 = por %p50, %p51
      %s53 = ssub.s32 %s19, %s26
      %p54 = scmp.eq.s32.totalorder %s53, 0
      %s56 = sadd.s32 %s55, 1
      %s57 = scalar_select %p54, %s55, %s56
      %p60 = pneg %p54
      %p61 = scmp.eq.s32.totalorder %s19, 3
      %p62 = por %p60, %p61
      %p63 = scmp.ne.s32.totalorder %s55, %s58
      %p64 = scmp.eq.s32.totalorder %s19, 0
      %p65 = por %p63, %p64
      %p66 = scmp.ne.s32.totalorder %s55, %s58
      %p67 = scmp.eq.s32.totalorder %s24, 3
      %p68 = por %p66, %p67
      %p69 = scmp.ne.s32.totalorder %s58, %s59
      %p70 = scmp.eq.s32.totalorder %s24, 0
      %p71 = por %p69, %p70
      %p72 = scmp.ne.s32.totalorder %s58, %s59
      %p73 = scmp.eq.s32.totalorder %s25, 3
      %p74 = por %p72, %p73
      %p76 = scmp.ne.s32.totalorder %s59, %s75
      %p77 = scmp.eq.s32.totalorder %s25, 0
      %p78 = por %p76, %p77
      %s79 = ssub.s32 %s19, %s26
      %p80 = scmp.eq.s32.totalorder %s79, 0
      %s82 = sadd.s32 %s81, 1
      %s83 = scalar_select %p80, %s81, %s82
      %p86 = pneg %p80
      %p87 = scmp.eq.s32.totalorder %s19, 3
      %p88 = por %p86, %p87
      %p89 = scmp.ne.s32.totalorder %s81, %s84
      %p90 = scmp.eq.s32.totalorder %s19, 0
      %p91 = por %p89, %p90
      %p92 = scmp.ne.s32.totalorder %s81, %s84
      %p93 = scmp.eq.s32.totalorder %s24, 3
      %p94 = por %p92, %p93
      %p95 = scmp.ne.s32.totalorder %s84, %s85
      %p96 = scmp.eq.s32.totalorder %s24, 0
      %p97 = por %p95, %p96
      %p98 = scmp.ne.s32.totalorder %s84, %s85
      %p99 = scmp.eq.s32.totalorder %s25, 3
      %p100 = por %p98, %p99
      %p102 = scmp.ne.s32.totalorder %s85, %s101
      %p103 = scmp.eq.s32.totalorder %s25, 0
      %p104 = por %p102, %p103
      %s106 = sadd.s32 %s105, 1
      %p109 = scmp.eq.s32.totalorder %s19, 3
      %p110 = scmp.ne.s32.totalorder %s105, %s107
      %p111 = scmp.eq.s32.totalorder %s19, 0
      %p112 = por %p110, %p111
      %p113 = scmp.ne.s32.totalorder %s105, %s107
      %p114 = scmp.eq.s32.totalorder %s24, 3
      %p115 = por %p113, %p114
      %p116 = scmp.ne.s32.totalorder %s107, %s108
      %p117 = scmp.eq.s32.totalorder %s24, 0
      %p118 = por %p116, %p117
      %p119 = scmp.ne.s32.totalorder %s107, %s108
      %p120 = scmp.eq.s32.totalorder %s25, 3
      %p121 = por %p119, %p120
      %p123 = scmp.ne.s32.totalorder %s108, %s122
      %p124 = scmp.eq.s32.totalorder %s25, 0
      %p125 = por %p123, %p124
      %s127 = sadd.s32 %s126, 1
      %p130 = scmp.eq.s32.totalorder %s19, 3
      %p131 = scmp.ne.s32.totalorder %s126, %s128
      %p132 = scmp.eq.s32.totalorder %s19, 0
      %p133 = por %p131, %p132
      %p134 = scmp.ne.s32.totalorder %s126, %s128
      %p135 = scmp.eq.s32.totalorder %s24, 3
      %p136 = por %p134, %p135
      %p137 = scmp.ne.s32.totalorder %s128, %s129
      %p138 = scmp.eq.s32.totalorder %s24, 0
      %p139 = por %p137, %p138
      %p140 = scmp.ne.s32.totalorder %s128, %s129
      %p141 = scmp.eq.s32.totalorder %s25, 3
      %p142 = por %p140, %p141
      %p144 = scmp.ne.s32.totalorder %s129, %s143
      %p145 = scmp.eq.s32.totalorder %s25, 0
      %p146 = por %p144, %p145
      %s147 = ssub.s32 %s19, %s26
      %p148 = scmp.eq.s32.totalorder %s147, 0
      %s150 = sadd.s32 %s149, 1
      %s151 = scalar_select %p148, %s149, %s150
      %p154 = pneg %p148
      %p155 = scmp.eq.s32.totalorder %s19, 3
      %p156 = por %p154, %p155
      %p157 = scmp.ne.s32.totalorder %s149, %s152
      %p158 = scmp.eq.s32.totalorder %s19, 0
      %p159 = por %p157, %p158
      %p160 = scmp.ne.s32.totalorder %s149, %s152
      %p161 = scmp.eq.s32.totalorder %s24, 3
      %p162 = por %p160, %p161
      %p163 = scmp.ne.s32.totalorder %s152, %s153
      %p164 = scmp.eq.s32.totalorder %s24, 0
      %p165 = por %p163, %p164
      %p166 = scmp.ne.s32.totalorder %s152, %s153
      %p167 = scmp.eq.s32.totalorder %s25, 3
      %p168 = por %p166, %p167
      %p170 = scmp.ne.s32.totalorder %s153, %s169
      %p171 = scmp.eq.s32.totalorder %s25, 0
      %p172 = por %p170, %p171
      %s173 = ssub.s32 %s19, %s26
      %p174 = scmp.eq.s32.totalorder %s173, 0
      %s176 = sadd.s32 %s175, 1
      %s177 = scalar_select %p174, %s175, %s176
      %p180 = pneg %p174
      %p181 = scmp.eq.s32.totalorder %s19, 3
      %p182 = por %p180, %p181
      %p183 = scmp.ne.s32.totalorder %s175, %s178
      %p184 = scmp.eq.s32.totalorder %s19, 0
      %p185 = por %p183, %p184
      %p186 = scmp.ne.s32.totalorder %s175, %s178
      %p187 = scmp.eq.s32.totalorder %s24, 3
      %p188 = por %p186, %p187
      %p189 = scmp.ne.s32.totalorder %s178, %s179
      %p190 = scmp.eq.s32.totalorder %s24, 0
      %p191 = por %p189, %p190
      %p192 = scmp.ne.s32.totalorder %s178, %s179
      %p193 = scmp.eq.s32.totalorder %s25, 3
      %p194 = por %p192, %p193
      %p196 = scmp.ne.s32.totalorder %s179, %s195
      %p197 = scmp.eq.s32.totalorder %s25, 0
      %p198 = por %p196, %p197
      %p199 = scmp.le.s32.totalorder 1, %s19
      %p200 = scmp.lt.s32.totalorder %s19, 5
      %p201 = pnand %p199, %p200
      %p202 = pneg %p201
      // Predicated region
      $region9: #{tpu_custom_call.1} parent=5 // pred_check
        _
      $region10: #{tpu_custom_call.1} parent=5 // pred_check_branch
        %204 = sbr.rel (%p201) target = $region12
      $region11: #{tpu_custom_call.1} parent=5 // pred_region
        %s205 = ssub.s32 %s19, 1
        // Predicated region
        $region13: #{tpu_custom_call.1} parent=11 // pred_check
          %p206 = pneg %p118
        $region14: #{tpu_custom_call.1} parent=11 // pred_check_branch
          %208 = sbr.rel (%p206) target = $region16
        $region15: #{tpu_custom_call.1} parent=11 // pred_region
          _
        $region16: #{tpu_custom_call.1} parent=11 // pred_fallthru
          _
        // Predicated region
        $region17: #{tpu_custom_call.1} parent=11 // pred_check
          %p209 = pneg %p139
        $region18: #{tpu_custom_call.1} parent=11 // pred_check_branch
          %211 = sbr.rel (%p209) target = $region20
        $region19: #{tpu_custom_call.1} parent=11 // pred_region
          _
        $region20: #{tpu_custom_call.1} parent=11 // pred_fallthru
          _
      $region12: #{tpu_custom_call.1} parent=5 // pred_fallthru
        _
      %p212 = scmp.lt.s32.totalorder %s19, 4
      // Predicated region
      $region21: #{tpu_custom_call.1} parent=5 // pred_check
        %p213 = pneg %p212
      $region22: #{tpu_custom_call.1} parent=5 // pred_check_branch
        %215 = sbr.rel (%p213) target = $region24
      $region23: #{tpu_custom_call.1} parent=5 // pred_region
        // Predicated region
        $region25: #{tpu_custom_call.1} parent=23 // pred_check
          %p216 = pneg %p39
        $region26: #{tpu_custom_call.1} parent=23 // pred_check_branch
          %218 = sbr.rel (%p216) target = $region28
        $region27: #{tpu_custom_call.1} parent=23 // pred_region
          %p219 = scmp.lt.s32.totalorder %s19, 3
          %s220 = scalar_select %p219, %s19, 3
          %s221 = smul.addr %s220, 8
          %s222 = scalar_lea.vmem %s0, %s221
        $region28: #{tpu_custom_call.1} parent=23 // pred_fallthru
          _
        // Predicated region
        $region29: #{tpu_custom_call.1} parent=23 // pred_check
          %p223 = pneg %p65
        $region30: #{tpu_custom_call.1} parent=23 // pred_check_branch
          %225 = sbr.rel (%p223) target = $region32
        $region31: #{tpu_custom_call.1} parent=23 // pred_region
          %s226 = sand.u32 %s55, 1
          %s227 = scalar_lea.sflag [#allocation4], %s226
          %s228 = sand.u32 %s55, 1
          %s229 = smul.addr %s228, 64
          %s230 = scalar_lea.vmem [#allocation3], %s229
          %s231 = smul.u32 8, %s19
          %s233 = ssub.s32 1024, 1024
          %234 = vsyncadd %s227, %s233
          %s235 = smul.addr %s231, 128
          %s236 = scalar_lea.hbm %s1, %s235
          %s237 = sshll.u32 %s230, 4
          %s238 = int_to_ptr.vmem [resolvable:$true] %s237
          %243 = dma.hbm_to_vmem [thread:$0]  %s236, 1024, %s238, %s227, 128, 128, 8
        $region32: #{tpu_custom_call.1} parent=23 // pred_fallthru
          _
        // Predicated region
        $region33: #{tpu_custom_call.1} parent=23 // pred_check
          %p244 = pneg %p91
        $region34: #{tpu_custom_call.1} parent=23 // pred_check_branch
          %246 = sbr.rel (%p244) target = $region36
        $region35: #{tpu_custom_call.1} parent=23 // pred_region
          %p247 = scmp.lt.s32.totalorder %s19, 3
          %s248 = scalar_select %p247, %s19, 3
          %s249 = smul.addr %s248, 8
          %s250 = scalar_lea.vmem %s2, %s249
        $region36: #{tpu_custom_call.1} parent=23 // pred_fallthru
          _
      $region24: #{tpu_custom_call.1} parent=5 // pred_fallthru
        _
      %p251 = scmp.le.s32.totalorder 1, %s19
      %p252 = scmp.lt.s32.totalorder %s19, 5
      %p253 = pnand %p251, %p252
      %p254 = pneg %p253
      // Predicated region
      $region37: #{tpu_custom_call.1} parent=5 // pred_check
        _
      $region38: #{tpu_custom_call.1} parent=5 // pred_check_branch
        %256 = sbr.rel (%p253) target = $region40
      $region39: #{tpu_custom_call.1} parent=5 // pred_region
        %s257 = ssub.s32 %s19, 1
        %s258 = sand.u32 %s58, 1
        %s259 = scalar_lea.sflag [#allocation4], %s258
        %s260 = sand.u32 %s58, 1
        %s261 = smul.addr %s260, 64
        %s262 = scalar_lea.vmem [#allocation3], %s261
        // Predicated region
        $region41: #{tpu_custom_call.1} parent=39 // pred_check
          %p263 = pneg %p71
        $region42: #{tpu_custom_call.1} parent=39 // pred_check_branch
          %265 = sbr.rel (%p263) target = $region44
        $region43: #{tpu_custom_call.1} parent=39 // pred_region
          %266 = dma.done %s259, 1024
        $region44: #{tpu_custom_call.1} parent=39 // pred_fallthru
          _
        %p267 = scmp.lt.s32.totalorder %s24, 3
        %s268 = scalar_select %p267, %s24, 3
        %s269 = smul.addr %s268, 8
        %s270 = scalar_lea.vmem %s0, %s269
        %p271 = pneg %p45
        %p272 = pneg %p42
        %s273 = sand.u32 %s58, 1
        %s274 = scalar_lea.sflag [#allocation4], %s273
        %s275 = sand.u32 %s58, 1
        %s276 = smul.addr %s275, 64
        %s277 = scalar_lea.vmem [#allocation3], %s276
        %p278 = pneg %p71
        %p279 = pneg %p68
        %p280 = scmp.lt.s32.totalorder %s24, 3
        %s281 = scalar_select %p280, %s24, 3
        %s282 = smul.addr %s281, 8
        %s283 = scalar_lea.vmem %s2, %s282
        %p284 = pneg %p97
        %p285 = pneg %p94
        %p286 = pneg %p118
        %p287 = pneg %p115
        %p288 = pneg %p139
        %p289 = pneg %p136
        %p290 = pneg %p165
        %p291 = pneg %p162
        %s292 = sand.u32 %s152, 1
        %s293 = scalar_lea.sflag [#allocation5], %s292
        %s294 = sand.u32 %s152, 1
        %s295 = smul.addr %s294, 8
        %s296 = scalar_lea.vmem [#allocation6], %s295
        %p297 = pneg %p191
        %p298 = pneg %p188
        %p299 = scmp.lt.s32.totalorder %s24, 3
        %s300 = scalar_select %p299, %s24, 3
        %s301 = smul.addr %s300, 8
        %s302 = scalar_lea.vmem %s6, %s301
        %p303 = scmp.lt.s32.totalorder %s24, 3
        %s304 = scalar_select %p303, %s24, 3
        %s305 = smul.addr %s304, 8
        %s306 = scalar_lea.vmem %s0, %s305
        %s307 = smul.u32 8, %s24
        %p308 = scmp.lt.s32.totalorder %s24, 3
        %s309 = scalar_select %p308, %s24, 3
        %s310 = smul.addr %s309, 8
        %s311 = scalar_lea.vmem %s2, %s310
        %p312 = scmp.lt.s32.totalorder %s24, 3
        %s313 = scalar_select %p312, %s24, 3
        %s314 = smul.addr %s313, 8
        %s315 = scalar_lea.vmem %s6, %s314
        %v316 = vld [vmem:[%s306] sm:$0xff]
        %v317 = vld [vmem:[%s262] sm:$0xff]
        %v318 = vld [vmem:[%s262 + $0x8] sm:$0xff]
        %v319 = vld [vmem:[%s262 + $0x10] sm:$0xff]
        %v320 = vld [vmem:[%s262 + $0x18] sm:$0xff]
        %v321 = vld [vmem:[%s262 + $0x20] sm:$0xff]
        %v322 = vld [vmem:[%s262 + $0x28] sm:$0xff]
        %v323 = vld [vmem:[%s262 + $0x30] sm:$0xff]
        %v324 = vld [vmem:[%s262 + $0x38] sm:$0xff]
        %v325 = vld [vmem:[%s311] sm:$0xff]
        %v326 = vld [vmem:[%s3] sm:$0xff]
        %v327 = vld [vmem:[%s3 + $0x8] sm:$0xff]
        %v328 = vld [vmem:[%s3 + $0x10] sm:$0xff]
        %v329 = vld [vmem:[%s3 + $0x18] sm:$0xff]
        %v330 = vld [vmem:[%s4] sm:$0xff]
        %v331 = vld [vmem:[%s4 + $0x8] sm:$0xff]
        %v332 = vld [vmem:[%s4 + $0x10] sm:$0xff]
        %v333 = vld [vmem:[%s4 + $0x18] sm:$0xff]
        %v334 = vld [vmem:[%s4 + $0x20] sm:$0xff]
        %v335 = vld [vmem:[%s4 + $0x28] sm:$0xff]
        %v336 = vld [vmem:[%s4 + $0x30] sm:$0xff]
        %v337 = vld [vmem:[%s4 + $0x38] sm:$0xff]
        %v338 = vld [vmem:[%s4 + $0x40] sm:$0xff]
        %v339 = vld [vmem:[%s4 + $0x48] sm:$0xff]
        %v340 = vld [vmem:[%s4 + $0x50] sm:$0xff]
        %v341 = vld [vmem:[%s4 + $0x58] sm:$0xff]
        %vm342 = vcmask 261120
        %v344 = vsel %vm342, %v316, 0
        %346 = vmatprep.subr.mxu0 0.0
        %347 = vmatpush1.msra.mxu0 0.0
        %348 = vmatprep.subr.mxu0 0.0
        %349 = vmatpush1.msra.mxu0 0.0
        %350 = vmatprep.subr.mxu0 0.0
        %351 = vmatpush1.msra.mxu0 0.0
        %352 = vmatprep.subr.mxu0 0.0
        %353 = vmatpush1.msra.mxu0 0.0
        %354 = vmatprep.subr.mxu0 0.0
        %355 = vmatpush1.msra.mxu0 0.0
        %356 = vmatprep.subr.mxu0 0.0
        %357 = vmatpush1.msra.mxu0 0.0
        %358 = vmatprep.subr.mxu0 0.0
        %359 = vmatpush1.msra.mxu0 0.0
        %360 = vmatprep.subr.mxu0 0.0
        %361 = vmatpush1.msra.mxu0 0.0
        %362 = vmatprep.subr.mxu0 0.0
        %363 = vmatpush1.msra.mxu0 0.0
        %364 = vmatprep.subr.mxu0 0.0
        %365 = vmatpush1.msra.mxu0 0.0
        %366 = vmatprep.subr.mxu0 0.0
        %367 = vmatpush1.msra.mxu0 0.0
        %368 = vmatprep.subr.mxu0 0.0
        %369 = vmatpush1.msra.mxu0 0.0
        %370 = vmatprep.subr.mxu0 0.0
        %371 = vmatpush1.msra.mxu0 %v329
        %372 = vmatprep.subr.mxu0 0.0
        %373 = vmatpush1.msra.mxu0 %v328
        %374 = vmatprep.subr.mxu0 0.0
        %375 = vmatpush1.msra.mxu0 %v327
        %376 = vmatprep.subr.mxu0 0.0
        %377 = vmatpush1.msra.mxu0 %v326
        %378 = vmatprep.subr.mxu0 0.0
        %379 = vmatpush2.msra.mxu0 0.0
        %380 = vmatprep.subr.mxu0 0.0
        %381 = vmatpush2.msra.mxu0 0.0
        %382 = vmatprep.subr.mxu0 0.0
        %383 = vmatpush2.msra.mxu0 0.0
        %384 = vmatprep.subr.mxu0 0.0
        %385 = vmatpush2.msra.mxu0 0.0
        %386 = vmatprep.subr.mxu0 0.0
        %387 = vmatpush2.msra.mxu0 0.0
        %388 = vmatprep.subr.mxu0 0.0
        %389 = vmatpush2.msra.mxu0 0.0
        %390 = vmatprep.subr.mxu0 0.0
        %391 = vmatpush2.msra.mxu0 0.0
        %392 = vmatprep.subr.mxu0 0.0
        %393 = vmatpush2.msra.mxu0 0.0
        %394 = vmatprep.subr.mxu0 0.0
        %395 = vmatpush2.msra.mxu0 0.0
        %396 = vmatprep.subr.mxu0 0.0
        %397 = vmatpush2.msra.mxu0 0.0
        %398 = vmatprep.subr.mxu0 0.0
        %399 = vmatpush2.msra.mxu0 0.0
        %400 = vmatprep.subr.mxu0 0.0
        %401 = vmatpush2.msra.mxu0 0.0
        %402 = vmatprep.subr.mxu0 0.0
        %403 = vmatpush2.msra.mxu0 0.0
        %404 = vmatprep.subr.mxu0 0.0
        %405 = vmatpush2.msra.mxu0 0.0
        %406 = vmatprep.subr.mxu0 0.0
        %407 = vmatpush2.msra.mxu0 0.0
        %408 = vmatprep.subr.mxu0 0.0
        %409 = vmatpush2.msra.mxu0 0.0
        %410 = vmatprep.mubr.f32.mxu0 0.0
        %411 = vmatmul.mubr.f32.gmra.mxu0 %v344
        %v412 = vpop.f32.mrf.mxu0
        %v413 = vadd.f32 0.0, %v412
        %v414 = vpop.f32.mrf.mxu0
        %415 = vdwg.mxu0
        %v417 = vcombine.high %v413, %v413
        %v419 = vunpack.c.l.s4 1966171168
        %v420 = vunpack.c.0.s8 %v419
        %v421 = vlaneseq
        %v422 = vshrl.u32 %v421, 7
        %v423 = vsub.s32 %v420, %v422
        %v424 = vrot.slane %v413, %v423
        %v426 = vunpack.c.l.s4 1966171168
        %v427 = vunpack.c.0.s8 %v426
        %v428 = vlaneseq
        %v429 = vshrl.u32 %v428, 7
        %v430 = vsub.s32 %v427, %v429
        %v431 = vrot.slane %v417, %v430
        %v432 = vcombine.high %v424, %v424
        %v433 = vcombine.high %v431, %v431
        %v435 = vunpack.c.l.s4 1966171168
        %v436 = vunpack.c.0.s8 %v435
        %v437 = vlaneseq
        %v438 = vshrl.u32 %v437, 7
        %v439 = vsub.s32 %v436, %v438
        %v440 = vrot.slane %v424, %v439
        %v442 = vunpack.c.l.s4 1966171168
        %v443 = vunpack.c.0.s8 %v442
        %v444 = vlaneseq
        %v445 = vshrl.u32 %v444, 7
        %v446 = vsub.s32 %v443, %v445
        %v447 = vrot.slane %v431, %v446
        %v449 = vunpack.c.l.s4 1966171168
        %v450 = vunpack.c.0.s8 %v449
        %v451 = vlaneseq
        %v452 = vshrl.u32 %v451, 7
        %v453 = vsub.s32 %v450, %v452
        %v454 = vrot.slane %v432, %v453
        %v456 = vunpack.c.l.s4 1966171168
        %v457 = vunpack.c.0.s8 %v456
        %v458 = vlaneseq
        %v459 = vshrl.u32 %v458, 7
        %v460 = vsub.s32 %v457, %v459
        %v461 = vrot.slane %v433, %v460
        %v462 = vcombine.high %v440, %v440
        %v463 = vcombine.high %v447, %v447
        %v464 = vcombine.high %v454, %v454
        %v465 = vcombine.high %v461, %v461
        %vm466 = vcmask 523264
        %v467 = vsel %vm466, %v440, 0
        %v470 = vsel %vm466, %v317, 0
        %472 = vmatprep.subr.mxu0 0.0
        %473 = vmatpush1.xpose.msra.mxu0 0.0
        %474 = vmatprep.subr.mxu0 0.0
        %475 = vmatpush1.xpose.msra.mxu0 0.0
        %476 = vmatprep.subr.mxu0 0.0
        %477 = vmatpush1.xpose.msra.mxu0 0.0
        %478 = vmatprep.subr.mxu0 0.0
        %479 = vmatpush1.xpose.msra.mxu0 0.0
        %480 = vmatprep.subr.mxu0 0.0
        %481 = vmatpush1.xpose.msra.mxu0 0.0
        %482 = vmatprep.subr.mxu0 0.0
        %483 = vmatpush1.xpose.msra.mxu0 0.0
        %484 = vmatprep.subr.mxu0 0.0
        %485 = vmatpush1.xpose.msra.mxu0 0.0
        %486 = vmatprep.subr.mxu0 0.0
        %487 = vmatpush1.xpose.msra.mxu0 0.0
        %488 = vmatprep.subr.mxu0 0.0
        %489 = vmatpush1.xpose.msra.mxu0 0.0
        %490 = vmatprep.subr.mxu0 0.0
        %491 = vmatpush1.xpose.msra.mxu0 0.0
        %492 = vmatprep.subr.mxu0 0.0
        %493 = vmatpush1.xpose.msra.mxu0 0.0
        %494 = vmatprep.subr.mxu0 0.0
        %495 = vmatpush1.xpose.msra.mxu0 0.0
        %496 = vmatprep.subr.mxu0 0.0
        %497 = vmatpush1.xpose.msra.mxu0 0.0
        %498 = vmatprep.subr.mxu0 0.0
        %499 = vmatpush1.xpose.msra.mxu0 0.0
        %500 = vmatprep.subr.mxu0 0.0
        %501 = vmatpush1.xpose.msra.mxu0 0.0
        %502 = vmatprep.subr.mxu0 0.0
        %503 = vmatpush1.xpose.msra.mxu0 %v470
        %504 = vmatprep.subr.mxu0 0.0
        %505 = vmatpush2.xpose.msra.mxu0 0.0
        %506 = vmatprep.subr.mxu0 0.0
        %507 = vmatpush2.xpose.msra.mxu0 0.0
        %508 = vmatprep.subr.mxu0 0.0
        %509 = vmatpush2.xpose.msra.mxu0 0.0
        %510 = vmatprep.subr.mxu0 0.0
        %511 = vmatpush2.xpose.msra.mxu0 0.0
        %512 = vmatprep.subr.mxu0 0.0
        %513 = vmatpush2.xpose.msra.mxu0 0.0
        %514 = vmatprep.subr.mxu0 0.0
        %515 = vmatpush2.xpose.msra.mxu0 0.0
        %516 = vmatprep.subr.mxu0 0.0
        %517 = vmatpush2.xpose.msra.mxu0 0.0
        %518 = vmatprep.subr.mxu0 0.0
        %519 = vmatpush2.xpose.msra.mxu0 0.0
        %520 = vmatprep.subr.mxu0 0.0
        %521 = vmatpush2.xpose.msra.mxu0 0.0
        %522 = vmatprep.subr.mxu0 0.0
        %523 = vmatpush2.xpose.msra.mxu0 0.0
        %524 = vmatprep.subr.mxu0 0.0
        %525 = vmatpush2.xpose.msra.mxu0 0.0
        %526 = vmatprep.subr.mxu0 0.0
        %527 = vmatpush2.xpose.msra.mxu0 0.0
        %528 = vmatprep.subr.mxu0 0.0
        %529 = vmatpush2.xpose.msra.mxu0 0.0
        %530 = vmatprep.subr.mxu0 0.0
        %531 = vmatpush2.xpose.msra.mxu0 0.0
        %532 = vmatprep.subr.mxu0 0.0
        %533 = vmatpush2.xpose.msra.mxu0 0.0
        %534 = vmatprep.subr.mxu0 0.0
        %535 = vmatpush2.xpose.msra.mxu0 0.0
        %536 = vmatprep.mubr.f32.mxu0 0.0
        %537 = vmatmul.mubr.f32.gmra.mxu0 %v467
        %v538 = vpop.f32.mrf.mxu0
        %v539 = vadd.f32 0.0, %v538
        %v540 = vpop.f32.mrf.mxu0
        %541 = vdwg.mxu0
        %v542 = vsel %vm466, %v454, 0
        %v545 = vsel %vm466, %v318, 0
        %547 = vmatprep.subr.mxu0 0.0
        %548 = vmatpush1.xpose.msra.mxu0 0.0
        %549 = vmatprep.subr.mxu0 0.0
        %550 = vmatpush1.xpose.msra.mxu0 0.0
        %551 = vmatprep.subr.mxu0 0.0
        %552 = vmatpush1.xpose.msra.mxu0 0.0
        %553 = vmatprep.subr.mxu0 0.0
        %554 = vmatpush1.xpose.msra.mxu0 0.0
        %555 = vmatprep.subr.mxu0 0.0
        %556 = vmatpush1.xpose.msra.mxu0 0.0
        %557 = vmatprep.subr.mxu0 0.0
        %558 = vmatpush1.xpose.msra.mxu0 0.0
        %559 = vmatprep.subr.mxu0 0.0
        %560 = vmatpush1.xpose.msra.mxu0 0.0
        %561 = vmatprep.subr.mxu0 0.0
        %562 = vmatpush1.xpose.msra.mxu0 0.0
        %563 = vmatprep.subr.mxu0 0.0
        %564 = vmatpush1.xpose.msra.mxu0 0.0
        %565 = vmatprep.subr.mxu0 0.0
        %566 = vmatpush1.xpose.msra.mxu0 0.0
        %567 = vmatprep.subr.mxu0 0.0
        %568 = vmatpush1.xpose.msra.mxu0 0.0
        %569 = vmatprep.subr.mxu0 0.0
        %570 = vmatpush1.xpose.msra.mxu0 0.0
        %571 = vmatprep.subr.mxu0 0.0
        %572 = vmatpush1.xpose.msra.mxu0 0.0
        %573 = vmatprep.subr.mxu0 0.0
        %574 = vmatpush1.xpose.msra.mxu0 0.0
        %575 = vmatprep.subr.mxu0 0.0
        %576 = vmatpush1.xpose.msra.mxu0 0.0
        %577 = vmatprep.subr.mxu0 0.0
        %578 = vmatpush1.xpose.msra.mxu0 %v545
        %579 = vmatprep.subr.mxu0 0.0
        %580 = vmatpush2.xpose.msra.mxu0 0.0
        %581 = vmatprep.subr.mxu0 0.0
        %582 = vmatpush2.xpose.msra.mxu0 0.0
        %583 = vmatprep.subr.mxu0 0.0
        %584 = vmatpush2.xpose.msra.mxu0 0.0
        %585 = vmatprep.subr.mxu0 0.0
        %586 = vmatpush2.xpose.msra.mxu0 0.0
        %587 = vmatprep.subr.mxu0 0.0
        %588 = vmatpush2.xpose.msra.mxu0 0.0
        %589 = vmatprep.subr.mxu0 0.0
        %590 = vmatpush2.xpose.msra.mxu0 0.0
        %591 = vmatprep.subr.mxu0 0.0
        %592 = vmatpush2.xpose.msra.mxu0 0.0
        %593 = vmatprep.subr.mxu0 0.0
        %594 = vmatpush2.xpose.msra.mxu0 0.0
        %595 = vmatprep.subr.mxu0 0.0
        %596 = vmatpush2.xpose.msra.mxu0 0.0
        %597 = vmatprep.subr.mxu0 0.0
        %598 = vmatpush2.xpose.msra.mxu0 0.0
        %599 = vmatprep.subr.mxu0 0.0
        %600 = vmatpush2.xpose.msra.mxu0 0.0
        %601 = vmatprep.subr.mxu0 0.0
        %602 = vmatpush2.xpose.msra.mxu0 0.0
        %603 = vmatprep.subr.mxu0 0.0
        %604 = vmatpush2.xpose.msra.mxu0 0.0
        %605 = vmatprep.subr.mxu0 0.0
        %606 = vmatpush2.xpose.msra.mxu0 0.0
        %607 = vmatprep.subr.mxu0 0.0
        %608 = vmatpush2.xpose.msra.mxu0 0.0
        %609 = vmatprep.subr.mxu0 0.0
        %610 = vmatpush2.xpose.msra.mxu0 0.0
        %611 = vmatprep.mubr.f32.mxu0 0.0
        %612 = vmatmul.mubr.f32.gmra.mxu0 %v542
        %v613 = vpop.f32.mrf.mxu0
        %v614 = vadd.f32 0.0, %v613
        %v615 = vpop.f32.mrf.mxu0
        %616 = vdwg.mxu0
        %v617 = vsel %vm466, %v462, 0
        %v620 = vsel %vm466, %v319, 0
        %622 = vmatprep.subr.mxu0 0.0
        %623 = vmatpush1.xpose.msra.mxu0 0.0
        %624 = vmatprep.subr.mxu0 0.0
        %625 = vmatpush1.xpose.msra.mxu0 0.0
        %626 = vmatprep.subr.mxu0 0.0
        %627 = vmatpush1.xpose.msra.mxu0 0.0
        %628 = vmatprep.subr.mxu0 0.0
        %629 = vmatpush1.xpose.msra.mxu0 0.0
        %630 = vmatprep.subr.mxu0 0.0
        %631 = vmatpush1.xpose.msra.mxu0 0.0
        %632 = vmatprep.subr.mxu0 0.0
        %633 = vmatpush1.xpose.msra.mxu0 0.0
        %634 = vmatprep.subr.mxu0 0.0
        %635 = vmatpush1.xpose.msra.mxu0 0.0
        %636 = vmatprep.subr.mxu0 0.0
        %637 = vmatpush1.xpose.msra.mxu0 0.0
        %638 = vmatprep.subr.mxu0 0.0
        %639 = vmatpush1.xpose.msra.mxu0 0.0
        %640 = vmatprep.subr.mxu0 0.0
        %641 = vmatpush1.xpose.msra.mxu0 0.0
        %642 = vmatprep.subr.mxu0 0.0
        %643 = vmatpush1.xpose.msra.mxu0 0.0
        %644 = vmatprep.subr.mxu0 0.0
        %645 = vmatpush1.xpose.msra.mxu0 0.0
        %646 = vmatprep.subr.mxu0 0.0
        %647 = vmatpush1.xpose.msra.mxu0 0.0
        %648 = vmatprep.subr.mxu0 0.0
        %649 = vmatpush1.xpose.msra.mxu0 0.0
        %650 = vmatprep.subr.mxu0 0.0
        %651 = vmatpush1.xpose.msra.mxu0 0.0
        %652 = vmatprep.subr.mxu0 0.0
        %653 = vmatpush1.xpose.msra.mxu0 %v620
        %654 = vmatprep.subr.mxu0 0.0
        %655 = vmatpush2.xpose.msra.mxu0 0.0
        %656 = vmatprep.subr.mxu0 0.0
        %657 = vmatpush2.xpose.msra.mxu0 0.0
        %658 = vmatprep.subr.mxu0 0.0
        %659 = vmatpush2.xpose.msra.mxu0 0.0
        %660 = vmatprep.subr.mxu0 0.0
        %661 = vmatpush2.xpose.msra.mxu0 0.0
        %662 = vmatprep.subr.mxu0 0.0
        %663 = vmatpush2.xpose.msra.mxu0 0.0
        %664 = vmatprep.subr.mxu0 0.0
        %665 = vmatpush2.xpose.msra.mxu0 0.0
        %666 = vmatprep.subr.mxu0 0.0
        %667 = vmatpush2.xpose.msra.mxu0 0.0
        %668 = vmatprep.subr.mxu0 0.0
        %669 = vmatpush2.xpose.msra.mxu0 0.0
        %670 = vmatprep.subr.mxu0 0.0
        %671 = vmatpush2.xpose.msra.mxu0 0.0
        %672 = vmatprep.subr.mxu0 0.0
        %673 = vmatpush2.xpose.msra.mxu0 0.0
        %674 = vmatprep.subr.mxu0 0.0
        %675 = vmatpush2.xpose.msra.mxu0 0.0
        %676 = vmatprep.subr.mxu0 0.0
        %677 = vmatpush2.xpose.msra.mxu0 0.0
        %678 = vmatprep.subr.mxu0 0.0
        %679 = vmatpush2.xpose.msra.mxu0 0.0
        %680 = vmatprep.subr.mxu0 0.0
        %681 = vmatpush2.xpose.msra.mxu0 0.0
        %682 = vmatprep.subr.mxu0 0.0
        %683 = vmatpush2.xpose.msra.mxu0 0.0
        %684 = vmatprep.subr.mxu0 0.0
        %685 = vmatpush2.xpose.msra.mxu0 0.0
        %686 = vmatprep.mubr.f32.mxu0 0.0
        %687 = vmatmul.mubr.f32.gmra.mxu0 %v617
        %v688 = vpop.f32.mrf.mxu0
        %v689 = vadd.f32 0.0, %v688
        %v690 = vpop.f32.mrf.mxu0
        %691 = vdwg.mxu0
        %v692 = vsel %vm466, %v464, 0
        %v695 = vsel %vm466, %v320, 0
        %697 = vmatprep.subr.mxu0 0.0
        %698 = vmatpush1.xpose.msra.mxu0 0.0
        %699 = vmatprep.subr.mxu0 0.0
        %700 = vmatpush1.xpose.msra.mxu0 0.0
        %701 = vmatprep.subr.mxu0 0.0
        %702 = vmatpush1.xpose.msra.mxu0 0.0
        %703 = vmatprep.subr.mxu0 0.0
        %704 = vmatpush1.xpose.msra.mxu0 0.0
        %705 = vmatprep.subr.mxu0 0.0
        %706 = vmatpush1.xpose.msra.mxu0 0.0
        %707 = vmatprep.subr.mxu0 0.0
        %708 = vmatpush1.xpose.msra.mxu0 0.0
        %709 = vmatprep.subr.mxu0 0.0
        %710 = vmatpush1.xpose.msra.mxu0 0.0
        %711 = vmatprep.subr.mxu0 0.0
        %712 = vmatpush1.xpose.msra.mxu0 0.0
        %713 = vmatprep.subr.mxu0 0.0
        %714 = vmatpush1.xpose.msra.mxu0 0.0
        %715 = vmatprep.subr.mxu0 0.0
        %716 = vmatpush1.xpose.msra.mxu0 0.0
        %717 = vmatprep.subr.mxu0 0.0
        %718 = vmatpush1.xpose.msra.mxu0 0.0
        %719 = vmatprep.subr.mxu0 0.0
        %720 = vmatpush1.xpose.msra.mxu0 0.0
        %721 = vmatprep.subr.mxu0 0.0
        %722 = vmatpush1.xpose.msra.mxu0 0.0
        %723 = vmatprep.subr.mxu0 0.0
        %724 = vmatpush1.xpose.msra.mxu0 0.0
        %725 = vmatprep.subr.mxu0 0.0
        %726 = vmatpush1.xpose.msra.mxu0 0.0
        %727 = vmatprep.subr.mxu0 0.0
        %728 = vmatpush1.xpose.msra.mxu0 %v695
        %729 = vmatprep.subr.mxu0 0.0
        %730 = vmatpush2.xpose.msra.mxu0 0.0
        %731 = vmatprep.subr.mxu0 0.0
        %732 = vmatpush2.xpose.msra.mxu0 0.0
        %733 = vmatprep.subr.mxu0 0.0
        %734 = vmatpush2.xpose.msra.mxu0 0.0
        %735 = vmatprep.subr.mxu0 0.0
        %736 = vmatpush2.xpose.msra.mxu0 0.0
        %737 = vmatprep.subr.mxu0 0.0
        %738 = vmatpush2.xpose.msra.mxu0 0.0
        %739 = vmatprep.subr.mxu0 0.0
        %740 = vmatpush2.xpose.msra.mxu0 0.0
        %741 = vmatprep.subr.mxu0 0.0
        %742 = vmatpush2.xpose.msra.mxu0 0.0
        %743 = vmatprep.subr.mxu0 0.0
        %744 = vmatpush2.xpose.msra.mxu0 0.0
        %745 = vmatprep.subr.mxu0 0.0
        %746 = vmatpush2.xpose.msra.mxu0 0.0
        %747 = vmatprep.subr.mxu0 0.0
        %748 = vmatpush2.xpose.msra.mxu0 0.0
        %749 = vmatprep.subr.mxu0 0.0
        %750 = vmatpush2.xpose.msra.mxu0 0.0
        %751 = vmatprep.subr.mxu0 0.0
        %752 = vmatpush2.xpose.msra.mxu0 0.0
        %753 = vmatprep.subr.mxu0 0.0
        %754 = vmatpush2.xpose.msra.mxu0 0.0
        %755 = vmatprep.subr.mxu0 0.0
        %756 = vmatpush2.xpose.msra.mxu0 0.0
        %757 = vmatprep.subr.mxu0 0.0
        %758 = vmatpush2.xpose.msra.mxu0 0.0
        %759 = vmatprep.subr.mxu0 0.0
        %760 = vmatpush2.xpose.msra.mxu0 0.0
        %761 = vmatprep.mubr.f32.mxu0 0.0
        %762 = vmatmul.mubr.f32.gmra.mxu0 %v692
        %v763 = vpop.f32.mrf.mxu0
        %v764 = vadd.f32 0.0, %v763
        %v765 = vpop.f32.mrf.mxu0
        %766 = vdwg.mxu0
        %v767 = vsel %vm466, %v447, 0
        %v770 = vsel %vm466, %v321, 0
        %772 = vmatprep.subr.mxu0 0.0
        %773 = vmatpush1.xpose.msra.mxu0 0.0
        %774 = vmatprep.subr.mxu0 0.0
        %775 = vmatpush1.xpose.msra.mxu0 0.0
        %776 = vmatprep.subr.mxu0 0.0
        %777 = vmatpush1.xpose.msra.mxu0 0.0
        %778 = vmatprep.subr.mxu0 0.0
        %779 = vmatpush1.xpose.msra.mxu0 0.0
        %780 = vmatprep.subr.mxu0 0.0
        %781 = vmatpush1.xpose.msra.mxu0 0.0
        %782 = vmatprep.subr.mxu0 0.0
        %783 = vmatpush1.xpose.msra.mxu0 0.0
        %784 = vmatprep.subr.mxu0 0.0
        %785 = vmatpush1.xpose.msra.mxu0 0.0
        %786 = vmatprep.subr.mxu0 0.0
        %787 = vmatpush1.xpose.msra.mxu0 0.0
        %788 = vmatprep.subr.mxu0 0.0
        %789 = vmatpush1.xpose.msra.mxu0 0.0
        %790 = vmatprep.subr.mxu0 0.0
        %791 = vmatpush1.xpose.msra.mxu0 0.0
        %792 = vmatprep.subr.mxu0 0.0
        %793 = vmatpush1.xpose.msra.mxu0 0.0
        %794 = vmatprep.subr.mxu0 0.0
        %795 = vmatpush1.xpose.msra.mxu0 0.0
        %796 = vmatprep.subr.mxu0 0.0
        %797 = vmatpush1.xpose.msra.mxu0 0.0
        %798 = vmatprep.subr.mxu0 0.0
        %799 = vmatpush1.xpose.msra.mxu0 0.0
        %800 = vmatprep.subr.mxu0 0.0
        %801 = vmatpush1.xpose.msra.mxu0 0.0
        %802 = vmatprep.subr.mxu0 0.0
        %803 = vmatpush1.xpose.msra.mxu0 %v770
        %804 = vmatprep.subr.mxu0 0.0
        %805 = vmatpush2.xpose.msra.mxu0 0.0
        %806 = vmatprep.subr.mxu0 0.0
        %807 = vmatpush2.xpose.msra.mxu0 0.0
        %808 = vmatprep.subr.mxu0 0.0
        %809 = vmatpush2.xpose.msra.mxu0 0.0
        %810 = vmatprep.subr.mxu0 0.0
        %811 = vmatpush2.xpose.msra.mxu0 0.0
        %812 = vmatprep.subr.mxu0 0.0
        %813 = vmatpush2.xpose.msra.mxu0 0.0
        %814 = vmatprep.subr.mxu0 0.0
        %815 = vmatpush2.xpose.msra.mxu0 0.0
        %816 = vmatprep.subr.mxu0 0.0
        %817 = vmatpush2.xpose.msra.mxu0 0.0
        %818 = vmatprep.subr.mxu0 0.0
        %819 = vmatpush2.xpose.msra.mxu0 0.0
        %820 = vmatprep.subr.mxu0 0.0
        %821 = vmatpush2.xpose.msra.mxu0 0.0
        %822 = vmatprep.subr.mxu0 0.0
        %823 = vmatpush2.xpose.msra.mxu0 0.0
        %824 = vmatprep.subr.mxu0 0.0
        %825 = vmatpush2.xpose.msra.mxu0 0.0
        %826 = vmatprep.subr.mxu0 0.0
        %827 = vmatpush2.xpose.msra.mxu0 0.0
        %828 = vmatprep.subr.mxu0 0.0
        %829 = vmatpush2.xpose.msra.mxu0 0.0
        %830 = vmatprep.subr.mxu0 0.0
        %831 = vmatpush2.xpose.msra.mxu0 0.0
        %832 = vmatprep.subr.mxu0 0.0
        %833 = vmatpush2.xpose.msra.mxu0 0.0
        %834 = vmatprep.subr.mxu0 0.0
        %835 = vmatpush2.xpose.msra.mxu0 0.0
        %836 = vmatprep.mubr.f32.mxu0 0.0
        %837 = vmatmul.mubr.f32.gmra.mxu0 %v767
        %v838 = vpop.f32.mrf.mxu0
        %v839 = vadd.f32 0.0, %v838
        %v840 = vpop.f32.mrf.mxu0
        %841 = vdwg.mxu0
        %v842 = vsel %vm466, %v461, 0
        %v845 = vsel %vm466, %v322, 0
        %847 = vmatprep.subr.mxu0 0.0
        %848 = vmatpush1.xpose.msra.mxu0 0.0
        %849 = vmatprep.subr.mxu0 0.0
        %850 = vmatpush1.xpose.msra.mxu0 0.0
        %851 = vmatprep.subr.mxu0 0.0
        %852 = vmatpush1.xpose.msra.mxu0 0.0
        %853 = vmatprep.subr.mxu0 0.0
        %854 = vmatpush1.xpose.msra.mxu0 0.0
        %855 = vmatprep.subr.mxu0 0.0
        %856 = vmatpush1.xpose.msra.mxu0 0.0
        %857 = vmatprep.subr.mxu0 0.0
        %858 = vmatpush1.xpose.msra.mxu0 0.0
        %859 = vmatprep.subr.mxu0 0.0
        %860 = vmatpush1.xpose.msra.mxu0 0.0
        %861 = vmatprep.subr.mxu0 0.0
        %862 = vmatpush1.xpose.msra.mxu0 0.0
        %863 = vmatprep.subr.mxu0 0.0
        %864 = vmatpush1.xpose.msra.mxu0 0.0
        %865 = vmatprep.subr.mxu0 0.0
        %866 = vmatpush1.xpose.msra.mxu0 0.0
        %867 = vmatprep.subr.mxu0 0.0
        %868 = vmatpush1.xpose.msra.mxu0 0.0
        %869 = vmatprep.subr.mxu0 0.0
        %870 = vmatpush1.xpose.msra.mxu0 0.0
        %871 = vmatprep.subr.mxu0 0.0
        %872 = vmatpush1.xpose.msra.mxu0 0.0
        %873 = vmatprep.subr.mxu0 0.0
        %874 = vmatpush1.xpose.msra.mxu0 0.0
        %875 = vmatprep.subr.mxu0 0.0
        %876 = vmatpush1.xpose.msra.mxu0 0.0
        %877 = vmatprep.subr.mxu0 0.0
        %878 = vmatpush1.xpose.msra.mxu0 %v845
        %879 = vmatprep.subr.mxu0 0.0
        %880 = vmatpush2.xpose.msra.mxu0 0.0
        %881 = vmatprep.subr.mxu0 0.0
        %882 = vmatpush2.xpose.msra.mxu0 0.0
        %883 = vmatprep.subr.mxu0 0.0
        %884 = vmatpush2.xpose.msra.mxu0 0.0
        %885 = vmatprep.subr.mxu0 0.0
        %886 = vmatpush2.xpose.msra.mxu0 0.0
        %887 = vmatprep.subr.mxu0 0.0
        %888 = vmatpush2.xpose.msra.mxu0 0.0
        %889 = vmatprep.subr.mxu0 0.0
        %890 = vmatpush2.xpose.msra.mxu0 0.0
        %891 = vmatprep.subr.mxu0 0.0
        %892 = vmatpush2.xpose.msra.mxu0 0.0
        %893 = vmatprep.subr.mxu0 0.0
        %894 = vmatpush2.xpose.msra.mxu0 0.0
        %895 = vmatprep.subr.mxu0 0.0
        %896 = vmatpush2.xpose.msra.mxu0 0.0
        %897 = vmatprep.subr.mxu0 0.0
        %898 = vmatpush2.xpose.msra.mxu0 0.0
        %899 = vmatprep.subr.mxu0 0.0
        %900 = vmatpush2.xpose.msra.mxu0 0.0
        %901 = vmatprep.subr.mxu0 0.0
        %902 = vmatpush2.xpose.msra.mxu0 0.0
        %903 = vmatprep.subr.mxu0 0.0
        %904 = vmatpush2.xpose.msra.mxu0 0.0
        %905 = vmatprep.subr.mxu0 0.0
        %906 = vmatpush2.xpose.msra.mxu0 0.0
        %907 = vmatprep.subr.mxu0 0.0
        %908 = vmatpush2.xpose.msra.mxu0 0.0
        %909 = vmatprep.subr.mxu0 0.0
        %910 = vmatpush2.xpose.msra.mxu0 0.0
        %911 = vmatprep.mubr.f32.mxu0 0.0
        %912 = vmatmul.mubr.f32.gmra.mxu0 %v842
        %v913 = vpop.f32.mrf.mxu0
        %v914 = vadd.f32 0.0, %v913
        %v915 = vpop.f32.mrf.mxu0
        %916 = vdwg.mxu0
        %v917 = vsel %vm466, %v463, 0
        %v920 = vsel %vm466, %v323, 0
        %922 = vmatprep.subr.mxu0 0.0
        %923 = vmatpush1.xpose.msra.mxu0 0.0
        %924 = vmatprep.subr.mxu0 0.0
        %925 = vmatpush1.xpose.msra.mxu0 0.0
        %926 = vmatprep.subr.mxu0 0.0
        %927 = vmatpush1.xpose.msra.mxu0 0.0
        %928 = vmatprep.subr.mxu0 0.0
        %929 = vmatpush1.xpose.msra.mxu0 0.0
        %930 = vmatprep.subr.mxu0 0.0
        %931 = vmatpush1.xpose.msra.mxu0 0.0
        %932 = vmatprep.subr.mxu0 0.0
        %933 = vmatpush1.xpose.msra.mxu0 0.0
        %934 = vmatprep.subr.mxu0 0.0
        %935 = vmatpush1.xpose.msra.mxu0 0.0
        %936 = vmatprep.subr.mxu0 0.0
        %937 = vmatpush1.xpose.msra.mxu0 0.0
        %938 = vmatprep.subr.mxu0 0.0
        %939 = vmatpush1.xpose.msra.mxu0 0.0
        %940 = vmatprep.subr.mxu0 0.0
        %941 = vmatpush1.xpose.msra.mxu0 0.0
        %942 = vmatprep.subr.mxu0 0.0
        %943 = vmatpush1.xpose.msra.mxu0 0.0
        %944 = vmatprep.subr.mxu0 0.0
        %945 = vmatpush1.xpose.msra.mxu0 0.0
        %946 = vmatprep.subr.mxu0 0.0
        %947 = vmatpush1.xpose.msra.mxu0 0.0
        %948 = vmatprep.subr.mxu0 0.0
        %949 = vmatpush1.xpose.msra.mxu0 0.0
        %950 = vmatprep.subr.mxu0 0.0
        %951 = vmatpush1.xpose.msra.mxu0 0.0
        %952 = vmatprep.subr.mxu0 0.0
        %953 = vmatpush1.xpose.msra.mxu0 %v920
        %954 = vmatprep.subr.mxu0 0.0
        %955 = vmatpush2.xpose.msra.mxu0 0.0
        %956 = vmatprep.subr.mxu0 0.0
        %957 = vmatpush2.xpose.msra.mxu0 0.0
        %958 = vmatprep.subr.mxu0 0.0
        %959 = vmatpush2.xpose.msra.mxu0 0.0
        %960 = vmatprep.subr.mxu0 0.0
        %961 = vmatpush2.xpose.msra.mxu0 0.0
        %962 = vmatprep.subr.mxu0 0.0
        %963 = vmatpush2.xpose.msra.mxu0 0.0
        %964 = vmatprep.subr.mxu0 0.0
        %965 = vmatpush2.xpose.msra.mxu0 0.0
        %966 = vmatprep.subr.mxu0 0.0
        %967 = vmatpush2.xpose.msra.mxu0 0.0
        %968 = vmatprep.subr.mxu0 0.0
        %969 = vmatpush2.xpose.msra.mxu0 0.0
        %970 = vmatprep.subr.mxu0 0.0
        %971 = vmatpush2.xpose.msra.mxu0 0.0
        %972 = vmatprep.subr.mxu0 0.0
        %973 = vmatpush2.xpose.msra.mxu0 0.0
        %974 = vmatprep.subr.mxu0 0.0
        %975 = vmatpush2.xpose.msra.mxu0 0.0
        %976 = vmatprep.subr.mxu0 0.0
        %977 = vmatpush2.xpose.msra.mxu0 0.0
        %978 = vmatprep.subr.mxu0 0.0
        %979 = vmatpush2.xpose.msra.mxu0 0.0
        %980 = vmatprep.subr.mxu0 0.0
        %981 = vmatpush2.xpose.msra.mxu0 0.0
        %982 = vmatprep.subr.mxu0 0.0
        %983 = vmatpush2.xpose.msra.mxu0 0.0
        %984 = vmatprep.subr.mxu0 0.0
        %985 = vmatpush2.xpose.msra.mxu0 0.0
        %986 = vmatprep.mubr.f32.mxu0 0.0
        %987 = vmatmul.mubr.f32.gmra.mxu0 %v917
        %v988 = vpop.f32.mrf.mxu0
        %v989 = vadd.f32 0.0, %v988
        %v990 = vpop.f32.mrf.mxu0
        %991 = vdwg.mxu0
        %v992 = vsel %vm466, %v465, 0
        %v995 = vsel %vm466, %v324, 0
        %997 = vmatprep.subr.mxu0 0.0
        %998 = vmatpush1.xpose.msra.mxu0 0.0
        %999 = vmatprep.subr.mxu0 0.0
        %1000 = vmatpush1.xpose.msra.mxu0 0.0
        %1001 = vmatprep.subr.mxu0 0.0
        %1002 = vmatpush1.xpose.msra.mxu0 0.0
        %1003 = vmatprep.subr.mxu0 0.0
        %1004 = vmatpush1.xpose.msra.mxu0 0.0
        %1005 = vmatprep.subr.mxu0 0.0
        %1006 = vmatpush1.xpose.msra.mxu0 0.0
        %1007 = vmatprep.subr.mxu0 0.0
        %1008 = vmatpush1.xpose.msra.mxu0 0.0
        %1009 = vmatprep.subr.mxu0 0.0
        %1010 = vmatpush1.xpose.msra.mxu0 0.0
        %1011 = vmatprep.subr.mxu0 0.0
        %1012 = vmatpush1.xpose.msra.mxu0 0.0
        %1013 = vmatprep.subr.mxu0 0.0
        %1014 = vmatpush1.xpose.msra.mxu0 0.0
        %1015 = vmatprep.subr.mxu0 0.0
        %1016 = vmatpush1.xpose.msra.mxu0 0.0
        %1017 = vmatprep.subr.mxu0 0.0
        %1018 = vmatpush1.xpose.msra.mxu0 0.0
        %1019 = vmatprep.subr.mxu0 0.0
        %1020 = vmatpush1.xpose.msra.mxu0 0.0
        %1021 = vmatprep.subr.mxu0 0.0
        %1022 = vmatpush1.xpose.msra.mxu0 0.0
        %1023 = vmatprep.subr.mxu0 0.0
        %1024 = vmatpush1.xpose.msra.mxu0 0.0
        %1025 = vmatprep.subr.mxu0 0.0
        %1026 = vmatpush1.xpose.msra.mxu0 0.0
        %1027 = vmatprep.subr.mxu0 0.0
        %1028 = vmatpush1.xpose.msra.mxu0 %v995
        %1029 = vmatprep.subr.mxu0 0.0
        %1030 = vmatpush2.xpose.msra.mxu0 0.0
        %1031 = vmatprep.subr.mxu0 0.0
        %1032 = vmatpush2.xpose.msra.mxu0 0.0
        %1033 = vmatprep.subr.mxu0 0.0
        %1034 = vmatpush2.xpose.msra.mxu0 0.0
        %1035 = vmatprep.subr.mxu0 0.0
        %1036 = vmatpush2.xpose.msra.mxu0 0.0
        %1037 = vmatprep.subr.mxu0 0.0
        %1038 = vmatpush2.xpose.msra.mxu0 0.0
        %1039 = vmatprep.subr.mxu0 0.0
        %1040 = vmatpush2.xpose.msra.mxu0 0.0
        %1041 = vmatprep.subr.mxu0 0.0
        %1042 = vmatpush2.xpose.msra.mxu0 0.0
        %1043 = vmatprep.subr.mxu0 0.0
        %1044 = vmatpush2.xpose.msra.mxu0 0.0
        %1045 = vmatprep.subr.mxu0 0.0
        %1046 = vmatpush2.xpose.msra.mxu0 0.0
        %1047 = vmatprep.subr.mxu0 0.0
        %1048 = vmatpush2.xpose.msra.mxu0 0.0
        %1049 = vmatprep.subr.mxu0 0.0
        %1050 = vmatpush2.xpose.msra.mxu0 0.0
        %1051 = vmatprep.subr.mxu0 0.0
        %1052 = vmatpush2.xpose.msra.mxu0 0.0
        %1053 = vmatprep.subr.mxu0 0.0
        %1054 = vmatpush2.xpose.msra.mxu0 0.0
        %1055 = vmatprep.subr.mxu0 0.0
        %1056 = vmatpush2.xpose.msra.mxu0 0.0
        %1057 = vmatprep.subr.mxu0 0.0
        %1058 = vmatpush2.xpose.msra.mxu0 0.0
        %1059 = vmatprep.subr.mxu0 0.0
        %1060 = vmatpush2.xpose.msra.mxu0 0.0
        %1061 = vmatprep.mubr.f32.mxu0 0.0
        %1062 = vmatmul.mubr.f32.gmra.mxu0 %v992
        %v1063 = vpop.f32.mrf.mxu0
        %v1064 = vadd.f32 0.0, %v1063
        %v1065 = vpop.f32.mrf.mxu0
        %1066 = vdwg.mxu0
        %v1068 = vrot.slane %v325, 1
        %v1069 = vrot.slane %v325, 2
        %v1070 = vrot.slane %v325, 3
        %v1071 = vrot.slane %v325, 4
        %v1072 = vrot.slane %v325, 5
        %v1073 = vrot.slane %v325, 6
        %v1074 = vrot.slane %v325, 7
        %v1083 = vadd.f32 %v539, %v325
        %v1084 = vadd.f32 %v614, %v1068
        %v1085 = vadd.f32 %v689, %v1069
        %v1086 = vadd.f32 %v764, %v1070
        %v1087 = vadd.f32 %v839, %v1071
        %v1088 = vadd.f32 %v914, %v1072
        %v1089 = vadd.f32 %v989, %v1073
        %v1090 = vadd.f32 %v1064, %v1074
        %v1099 = vrot.slane %v1084, 7
        %vm1100 = vcmask 1041409
        %v1101 = vsel %vm1100, %v1099, %v1083
        %v1102 = vrot.slane %v1085, 6
        %vm1103 = vcmask 1042434
        %v1104 = vsel %vm1103, %v1102, %v1101
        %v1105 = vrot.slane %v1086, 5
        %vm1106 = vcmask 1043459
        %v1107 = vsel %vm1106, %v1105, %v1104
        %v1108 = vrot.slane %v1087, 4
        %vm1109 = vcmask 1044484
        %v1110 = vsel %vm1109, %v1108, %v1107
        %v1111 = vrot.slane %v1088, 3
        %vm1112 = vcmask 1045509
        %v1113 = vsel %vm1112, %v1111, %v1110
        %v1114 = vrot.slane %v1089, 2
        %vm1115 = vcmask 1046534
        %v1116 = vsel %vm1115, %v1114, %v1113
        %v1117 = vrot.slane %v1090, 1
        %vm1118 = vcmask 1047559
        %v1119 = vsel %vm1118, %v1117, %v1116
        %vm1121 = vcmask 64512
        %v1122 = vsel %vm1121, %v1119, -inf
        %1123 = vmax.xlane.f32.xlu0 %v1122
        %v1124 = vpop.xlane.xlu0 %1123
        %v1126 = vrot.slane %v1124, 1
        %v1127 = vrot.slane %v1124, 2
        %v1128 = vrot.slane %v1124, 3
        %v1129 = vrot.slane %v1124, 4
        %v1130 = vrot.slane %v1124, 5
        %v1131 = vrot.slane %v1124, 6
        %v1132 = vrot.slane %v1124, 7
        %v1141 = vsub.f32 %v1083, %v1124
        %v1142 = vsub.f32 %v1084, %v1126
        %v1143 = vsub.f32 %v1085, %v1127
        %v1144 = vsub.f32 %v1086, %v1128
        %v1145 = vsub.f32 %v1087, %v1129
        %v1146 = vsub.f32 %v1088, %v1130
        %v1147 = vsub.f32 %v1089, %v1131
        %v1148 = vsub.f32 %v1090, %v1132
        %v1149 = vmul.f32 %v1141, 1.442695
        %v1150 = vpow.pop %v1149
        %v1151 = vmul.f32 %v1142, 1.442695
        %v1152 = vpow.pop %v1151
        %v1153 = vmul.f32 %v1143, 1.442695
        %v1154 = vpow.pop %v1153
        %v1155 = vmul.f32 %v1144, 1.442695
        %v1156 = vpow.pop %v1155
        %v1157 = vmul.f32 %v1145, 1.442695
        %v1158 = vpow.pop %v1157
        %v1159 = vmul.f32 %v1146, 1.442695
        %v1160 = vpow.pop %v1159
        %v1161 = vmul.f32 %v1147, 1.442695
        %v1162 = vpow.pop %v1161
        %v1163 = vmul.f32 %v1148, 1.442695
        %v1164 = vpow.pop %v1163
        %v1173 = vrot.slane %v1152, 7
        %v1174 = vsel %vm1100, %v1173, %v1150
        %v1175 = vrot.slane %v1154, 6
        %v1176 = vsel %vm1103, %v1175, %v1174
        %v1177 = vrot.slane %v1156, 5
        %v1178 = vsel %vm1106, %v1177, %v1176
        %v1179 = vrot.slane %v1158, 4
        %v1180 = vsel %vm1109, %v1179, %v1178
        %v1181 = vrot.slane %v1160, 3
        %v1182 = vsel %vm1112, %v1181, %v1180
        %v1183 = vrot.slane %v1162, 2
        %v1184 = vsel %vm1115, %v1183, %v1182
        %v1185 = vrot.slane %v1164, 1
        %v1186 = vsel %vm1118, %v1185, %v1184
        %v1188 = vsel %vm1121, %v1186, 0.0
        %1189 = vadd.xlane.f32.xlu0 %v1188
        %v1190 = vpop.xlane.xlu0 %1189
        %v1191 = vrcp.pop %v1190
        %v1193 = vrot.slane %v1191, 1
        %v1194 = vrot.slane %v1191, 2
        %v1195 = vrot.slane %v1191, 3
        %v1196 = vrot.slane %v1191, 4
        %v1197 = vrot.slane %v1191, 5
        %v1198 = vrot.slane %v1191, 6
        %v1199 = vrot.slane %v1191, 7
        %v1208 = vmul.f32 %v1150, %v1191
        %v1209 = vmul.f32 %v1152, %v1193
        %v1210 = vmul.f32 %v1154, %v1194
        %v1211 = vmul.f32 %v1156, %v1195
        %v1212 = vmul.f32 %v1158, %v1196
        %v1213 = vmul.f32 %v1160, %v1197
        %v1214 = vmul.f32 %v1162, %v1198
        %v1215 = vmul.f32 %v1164, %v1199
        %v1224 = vrot.slane %v1209, 7
        %v1225 = vsel %vm1100, %v1224, %v1208
        %v1226 = vrot.slane %v1210, 6
        %v1227 = vsel %vm1103, %v1226, %v1225
        %v1228 = vrot.slane %v1211, 5
        %v1229 = vsel %vm1106, %v1228, %v1227
        %v1230 = vrot.slane %v1212, 4
        %v1231 = vsel %vm1109, %v1230, %v1229
        %v1232 = vrot.slane %v1213, 3
        %v1233 = vsel %vm1112, %v1232, %v1231
        %v1234 = vrot.slane %v1214, 2
        %v1235 = vsel %vm1115, %v1234, %v1233
        %v1236 = vrot.slane %v1215, 1
        %v1237 = vsel %vm1118, %v1236, %v1235
        %1239 = vst.msk [vmem:[%s315] sm:$0xff] %vm1121, %v1237
        %v1240 = vsel %vm1121, %v1208, 0
        %1242 = vmatprep.subr.mxu0 0.0
        %1243 = vmatpush1.msra.mxu0 0.0
        %1244 = vmatprep.subr.mxu0 0.0
        %1245 = vmatpush1.msra.mxu0 0.0
        %1246 = vmatprep.subr.mxu0 0.0
        %1247 = vmatpush1.msra.mxu0 0.0
        %1248 = vmatprep.subr.mxu0 0.0
        %1249 = vmatpush1.msra.mxu0 0.0
        %1250 = vmatprep.subr.mxu0 0.0
        %1251 = vmatpush1.msra.mxu0 0.0
        %1252 = vmatprep.subr.mxu0 0.0
        %1253 = vmatpush1.msra.mxu0 0.0
        %1254 = vmatprep.subr.mxu0 0.0
        %1255 = vmatpush1.msra.mxu0 0.0
        %1256 = vmatprep.subr.mxu0 0.0
        %1257 = vmatpush1.msra.mxu0 0.0
        %1258 = vmatprep.subr.mxu0 0.0
        %1259 = vmatpush1.msra.mxu0 0.0
        %1260 = vmatprep.subr.mxu0 0.0
        %1261 = vmatpush1.msra.mxu0 0.0
        %1262 = vmatprep.subr.mxu0 0.0
        %1263 = vmatpush1.msra.mxu0 0.0
        %1264 = vmatprep.subr.mxu0 0.0
        %1265 = vmatpush1.msra.mxu0 0.0
        %1266 = vmatprep.subr.mxu0 0.0
        %1267 = vmatpush1.msra.mxu0 0.0
        %1268 = vmatprep.subr.mxu0 0.0
        %1269 = vmatpush1.msra.mxu0 0.0
        %1270 = vmatprep.subr.mxu0 0.0
        %1271 = vmatpush1.msra.mxu0 0.0
        %1272 = vmatprep.subr.mxu0 0.0
        %1273 = vmatpush1.msra.mxu0 %v317
        %1274 = vmatprep.subr.mxu0 0.0
        %1275 = vmatpush2.msra.mxu0 0.0
        %1276 = vmatprep.subr.mxu0 0.0
        %1277 = vmatpush2.msra.mxu0 0.0
        %1278 = vmatprep.subr.mxu0 0.0
        %1279 = vmatpush2.msra.mxu0 0.0
        %1280 = vmatprep.subr.mxu0 0.0
        %1281 = vmatpush2.msra.mxu0 0.0
        %1282 = vmatprep.subr.mxu0 0.0
        %1283 = vmatpush2.msra.mxu0 0.0
        %1284 = vmatprep.subr.mxu0 0.0
        %1285 = vmatpush2.msra.mxu0 0.0
        %1286 = vmatprep.subr.mxu0 0.0
        %1287 = vmatpush2.msra.mxu0 0.0
        %1288 = vmatprep.subr.mxu0 0.0
        %1289 = vmatpush2.msra.mxu0 0.0
        %1290 = vmatprep.subr.mxu0 0.0
        %1291 = vmatpush2.msra.mxu0 0.0
        %1292 = vmatprep.subr.mxu0 0.0
        %1293 = vmatpush2.msra.mxu0 0.0
        %1294 = vmatprep.subr.mxu0 0.0
        %1295 = vmatpush2.msra.mxu0 0.0
        %1296 = vmatprep.subr.mxu0 0.0
        %1297 = vmatpush2.msra.mxu0 0.0
        %1298 = vmatprep.subr.mxu0 0.0
        %1299 = vmatpush2.msra.mxu0 0.0
        %1300 = vmatprep.subr.mxu0 0.0
        %1301 = vmatpush2.msra.mxu0 0.0
        %1302 = vmatprep.subr.mxu0 0.0
        %1303 = vmatpush2.msra.mxu0 0.0
        %1304 = vmatprep.subr.mxu0 0.0
        %1305 = vmatpush2.msra.mxu0 0.0
        %1306 = vmatprep.mubr.f32.mxu0 0.0
        %1307 = vmatmul.mubr.f32.gmra.mxu0 %v1240
        %v1308 = vpop.f32.mrf.mxu0
        %v1309 = vadd.f32 0.0, %v1308
        %v1310 = vpop.f32.mrf.mxu0
        %1311 = vdwg.mxu0
        %v1312 = vsel %vm1121, %v1209, 0
        %1314 = vmatprep.subr.mxu0 0.0
        %1315 = vmatpush1.msra.mxu0 0.0
        %1316 = vmatprep.subr.mxu0 0.0
        %1317 = vmatpush1.msra.mxu0 0.0
        %1318 = vmatprep.subr.mxu0 0.0
        %1319 = vmatpush1.msra.mxu0 0.0
        %1320 = vmatprep.subr.mxu0 0.0
        %1321 = vmatpush1.msra.mxu0 0.0
        %1322 = vmatprep.subr.mxu0 0.0
        %1323 = vmatpush1.msra.mxu0 0.0
        %1324 = vmatprep.subr.mxu0 0.0
        %1325 = vmatpush1.msra.mxu0 0.0
        %1326 = vmatprep.subr.mxu0 0.0
        %1327 = vmatpush1.msra.mxu0 0.0
        %1328 = vmatprep.subr.mxu0 0.0
        %1329 = vmatpush1.msra.mxu0 0.0
        %1330 = vmatprep.subr.mxu0 0.0
        %1331 = vmatpush1.msra.mxu0 0.0
        %1332 = vmatprep.subr.mxu0 0.0
        %1333 = vmatpush1.msra.mxu0 0.0
        %1334 = vmatprep.subr.mxu0 0.0
        %1335 = vmatpush1.msra.mxu0 0.0
        %1336 = vmatprep.subr.mxu0 0.0
        %1337 = vmatpush1.msra.mxu0 0.0
        %1338 = vmatprep.subr.mxu0 0.0
        %1339 = vmatpush1.msra.mxu0 0.0
        %1340 = vmatprep.subr.mxu0 0.0
        %1341 = vmatpush1.msra.mxu0 0.0
        %1342 = vmatprep.subr.mxu0 0.0
        %1343 = vmatpush1.msra.mxu0 0.0
        %1344 = vmatprep.subr.mxu0 0.0
        %1345 = vmatpush1.msra.mxu0 %v318
        %1346 = vmatprep.subr.mxu0 0.0
        %1347 = vmatpush2.msra.mxu0 0.0
        %1348 = vmatprep.subr.mxu0 0.0
        %1349 = vmatpush2.msra.mxu0 0.0
        %1350 = vmatprep.subr.mxu0 0.0
        %1351 = vmatpush2.msra.mxu0 0.0
        %1352 = vmatprep.subr.mxu0 0.0
        %1353 = vmatpush2.msra.mxu0 0.0
        %1354 = vmatprep.subr.mxu0 0.0
        %1355 = vmatpush2.msra.mxu0 0.0
        %1356 = vmatprep.subr.mxu0 0.0
        %1357 = vmatpush2.msra.mxu0 0.0
        %1358 = vmatprep.subr.mxu0 0.0
        %1359 = vmatpush2.msra.mxu0 0.0
        %1360 = vmatprep.subr.mxu0 0.0
        %1361 = vmatpush2.msra.mxu0 0.0
        %1362 = vmatprep.subr.mxu0 0.0
        %1363 = vmatpush2.msra.mxu0 0.0
        %1364 = vmatprep.subr.mxu0 0.0
        %1365 = vmatpush2.msra.mxu0 0.0
        %1366 = vmatprep.subr.mxu0 0.0
        %1367 = vmatpush2.msra.mxu0 0.0
        %1368 = vmatprep.subr.mxu0 0.0
        %1369 = vmatpush2.msra.mxu0 0.0
        %1370 = vmatprep.subr.mxu0 0.0
        %1371 = vmatpush2.msra.mxu0 0.0
        %1372 = vmatprep.subr.mxu0 0.0
        %1373 = vmatpush2.msra.mxu0 0.0
        %1374 = vmatprep.subr.mxu0 0.0
        %1375 = vmatpush2.msra.mxu0 0.0
        %1376 = vmatprep.subr.mxu0 0.0
        %1377 = vmatpush2.msra.mxu0 0.0
        %1378 = vmatprep.mubr.f32.mxu0 0.0
        %1379 = vmatmul.mubr.f32.gmra.mxu0 %v1312
        %v1380 = vpop.f32.mrf.mxu0
        %v1381 = vadd.f32 0.0, %v1380
        %v1382 = vpop.f32.mrf.mxu0
        %1383 = vdwg.mxu0
        %v1384 = vsel %vm1121, %v1210, 0
        %1386 = vmatprep.subr.mxu0 0.0
        %1387 = vmatpush1.msra.mxu0 0.0
        %1388 = vmatprep.subr.mxu0 0.0
        %1389 = vmatpush1.msra.mxu0 0.0
        %1390 = vmatprep.subr.mxu0 0.0
        %1391 = vmatpush1.msra.mxu0 0.0
        %1392 = vmatprep.subr.mxu0 0.0
        %1393 = vmatpush1.msra.mxu0 0.0
        %1394 = vmatprep.subr.mxu0 0.0
        %1395 = vmatpush1.msra.mxu0 0.0
        %1396 = vmatprep.subr.mxu0 0.0
        %1397 = vmatpush1.msra.mxu0 0.0
        %1398 = vmatprep.subr.mxu0 0.0
        %1399 = vmatpush1.msra.mxu0 0.0
        %1400 = vmatprep.subr.mxu0 0.0
        %1401 = vmatpush1.msra.mxu0 0.0
        %1402 = vmatprep.subr.mxu0 0.0
        %1403 = vmatpush1.msra.mxu0 0.0
        %1404 = vmatprep.subr.mxu0 0.0
        %1405 = vmatpush1.msra.mxu0 0.0
        %1406 = vmatprep.subr.mxu0 0.0
        %1407 = vmatpush1.msra.mxu0 0.0
        %1408 = vmatprep.subr.mxu0 0.0
        %1409 = vmatpush1.msra.mxu0 0.0
        %1410 = vmatprep.subr.mxu0 0.0
        %1411 = vmatpush1.msra.mxu0 0.0
        %1412 = vmatprep.subr.mxu0 0.0
        %1413 = vmatpush1.msra.mxu0 0.0
        %1414 = vmatprep.subr.mxu0 0.0
        %1415 = vmatpush1.msra.mxu0 0.0
        %1416 = vmatprep.subr.mxu0 0.0
        %1417 = vmatpush1.msra.mxu0 %v319
        %1418 = vmatprep.subr.mxu0 0.0
        %1419 = vmatpush2.msra.mxu0 0.0
        %1420 = vmatprep.subr.mxu0 0.0
        %1421 = vmatpush2.msra.mxu0 0.0
        %1422 = vmatprep.subr.mxu0 0.0
        %1423 = vmatpush2.msra.mxu0 0.0
        %1424 = vmatprep.subr.mxu0 0.0
        %1425 = vmatpush2.msra.mxu0 0.0
        %1426 = vmatprep.subr.mxu0 0.0
        %1427 = vmatpush2.msra.mxu0 0.0
        %1428 = vmatprep.subr.mxu0 0.0
        %1429 = vmatpush2.msra.mxu0 0.0
        %1430 = vmatprep.subr.mxu0 0.0
        %1431 = vmatpush2.msra.mxu0 0.0
        %1432 = vmatprep.subr.mxu0 0.0
        %1433 = vmatpush2.msra.mxu0 0.0
        %1434 = vmatprep.subr.mxu0 0.0
        %1435 = vmatpush2.msra.mxu0 0.0
        %1436 = vmatprep.subr.mxu0 0.0
        %1437 = vmatpush2.msra.mxu0 0.0
        %1438 = vmatprep.subr.mxu0 0.0
        %1439 = vmatpush2.msra.mxu0 0.0
        %1440 = vmatprep.subr.mxu0 0.0
        %1441 = vmatpush2.msra.mxu0 0.0
        %1442 = vmatprep.subr.mxu0 0.0
        %1443 = vmatpush2.msra.mxu0 0.0
        %1444 = vmatprep.subr.mxu0 0.0
        %1445 = vmatpush2.msra.mxu0 0.0
        %1446 = vmatprep.subr.mxu0 0.0
        %1447 = vmatpush2.msra.mxu0 0.0
        %1448 = vmatprep.subr.mxu0 0.0
        %1449 = vmatpush2.msra.mxu0 0.0
        %1450 = vmatprep.mubr.f32.mxu0 0.0
        %1451 = vmatmul.mubr.f32.gmra.mxu0 %v1384
        %v1452 = vpop.f32.mrf.mxu0
        %v1453 = vadd.f32 0.0, %v1452
        %v1454 = vpop.f32.mrf.mxu0
        %1455 = vdwg.mxu0
        %v1456 = vsel %vm1121, %v1211, 0
        %1458 = vmatprep.subr.mxu0 0.0
        %1459 = vmatpush1.msra.mxu0 0.0
        %1460 = vmatprep.subr.mxu0 0.0
        %1461 = vmatpush1.msra.mxu0 0.0
        %1462 = vmatprep.subr.mxu0 0.0
        %1463 = vmatpush1.msra.mxu0 0.0
        %1464 = vmatprep.subr.mxu0 0.0
        %1465 = vmatpush1.msra.mxu0 0.0
        %1466 = vmatprep.subr.mxu0 0.0
        %1467 = vmatpush1.msra.mxu0 0.0
        %1468 = vmatprep.subr.mxu0 0.0
        %1469 = vmatpush1.msra.mxu0 0.0
        %1470 = vmatprep.subr.mxu0 0.0
        %1471 = vmatpush1.msra.mxu0 0.0
        %1472 = vmatprep.subr.mxu0 0.0
        %1473 = vmatpush1.msra.mxu0 0.0
        %1474 = vmatprep.subr.mxu0 0.0
        %1475 = vmatpush1.msra.mxu0 0.0
        %1476 = vmatprep.subr.mxu0 0.0
        %1477 = vmatpush1.msra.mxu0 0.0
        %1478 = vmatprep.subr.mxu0 0.0
        %1479 = vmatpush1.msra.mxu0 0.0
        %1480 = vmatprep.subr.mxu0 0.0
        %1481 = vmatpush1.msra.mxu0 0.0
        %1482 = vmatprep.subr.mxu0 0.0
        %1483 = vmatpush1.msra.mxu0 0.0
        %1484 = vmatprep.subr.mxu0 0.0
        %1485 = vmatpush1.msra.mxu0 0.0
        %1486 = vmatprep.subr.mxu0 0.0
        %1487 = vmatpush1.msra.mxu0 0.0
        %1488 = vmatprep.subr.mxu0 0.0
        %1489 = vmatpush1.msra.mxu0 %v320
        %1490 = vmatprep.subr.mxu0 0.0
        %1491 = vmatpush2.msra.mxu0 0.0
        %1492 = vmatprep.subr.mxu0 0.0
        %1493 = vmatpush2.msra.mxu0 0.0
        %1494 = vmatprep.subr.mxu0 0.0
        %1495 = vmatpush2.msra.mxu0 0.0
        %1496 = vmatprep.subr.mxu0 0.0
        %1497 = vmatpush2.msra.mxu0 0.0
        %1498 = vmatprep.subr.mxu0 0.0
        %1499 = vmatpush2.msra.mxu0 0.0
        %1500 = vmatprep.subr.mxu0 0.0
        %1501 = vmatpush2.msra.mxu0 0.0
        %1502 = vmatprep.subr.mxu0 0.0
        %1503 = vmatpush2.msra.mxu0 0.0
        %1504 = vmatprep.subr.mxu0 0.0
        %1505 = vmatpush2.msra.mxu0 0.0
        %1506 = vmatprep.subr.mxu0 0.0
        %1507 = vmatpush2.msra.mxu0 0.0
        %1508 = vmatprep.subr.mxu0 0.0
        %1509 = vmatpush2.msra.mxu0 0.0
        %1510 = vmatprep.subr.mxu0 0.0
        %1511 = vmatpush2.msra.mxu0 0.0
        %1512 = vmatprep.subr.mxu0 0.0
        %1513 = vmatpush2.msra.mxu0 0.0
        %1514 = vmatprep.subr.mxu0 0.0
        %1515 = vmatpush2.msra.mxu0 0.0
        %1516 = vmatprep.subr.mxu0 0.0
        %1517 = vmatpush2.msra.mxu0 0.0
        %1518 = vmatprep.subr.mxu0 0.0
        %1519 = vmatpush2.msra.mxu0 0.0
        %1520 = vmatprep.subr.mxu0 0.0
        %1521 = vmatpush2.msra.mxu0 0.0
        %1522 = vmatprep.mubr.f32.mxu0 0.0
        %1523 = vmatmul.mubr.f32.gmra.mxu0 %v1456
        %v1524 = vpop.f32.mrf.mxu0
        %v1525 = vadd.f32 0.0, %v1524
        %v1526 = vpop.f32.mrf.mxu0
        %1527 = vdwg.mxu0
        %v1528 = vsel %vm1121, %v1212, 0
        %1530 = vmatprep.subr.mxu0 0.0
        %1531 = vmatpush1.msra.mxu0 0.0
        %1532 = vmatprep.subr.mxu0 0.0
        %1533 = vmatpush1.msra.mxu0 0.0
        %1534 = vmatprep.subr.mxu0 0.0
        %1535 = vmatpush1.msra.mxu0 0.0
        %1536 = vmatprep.subr.mxu0 0.0
        %1537 = vmatpush1.msra.mxu0 0.0
        %1538 = vmatprep.subr.mxu0 0.0
        %1539 = vmatpush1.msra.mxu0 0.0
        %1540 = vmatprep.subr.mxu0 0.0
        %1541 = vmatpush1.msra.mxu0 0.0
        %1542 = vmatprep.subr.mxu0 0.0
        %1543 = vmatpush1.msra.mxu0 0.0
        %1544 = vmatprep.subr.mxu0 0.0
        %1545 = vmatpush1.msra.mxu0 0.0
        %1546 = vmatprep.subr.mxu0 0.0
        %1547 = vmatpush1.msra.mxu0 0.0
        %1548 = vmatprep.subr.mxu0 0.0
        %1549 = vmatpush1.msra.mxu0 0.0
        %1550 = vmatprep.subr.mxu0 0.0
        %1551 = vmatpush1.msra.mxu0 0.0
        %1552 = vmatprep.subr.mxu0 0.0
        %1553 = vmatpush1.msra.mxu0 0.0
        %1554 = vmatprep.subr.mxu0 0.0
        %1555 = vmatpush1.msra.mxu0 0.0
        %1556 = vmatprep.subr.mxu0 0.0
        %1557 = vmatpush1.msra.mxu0 0.0
        %1558 = vmatprep.subr.mxu0 0.0
        %1559 = vmatpush1.msra.mxu0 0.0
        %1560 = vmatprep.subr.mxu0 0.0
        %1561 = vmatpush1.msra.mxu0 %v321
        %1562 = vmatprep.subr.mxu0 0.0
        %1563 = vmatpush2.msra.mxu0 0.0
        %1564 = vmatprep.subr.mxu0 0.0
        %1565 = vmatpush2.msra.mxu0 0.0
        %1566 = vmatprep.subr.mxu0 0.0
        %1567 = vmatpush2.msra.mxu0 0.0
        %1568 = vmatprep.subr.mxu0 0.0
        %1569 = vmatpush2.msra.mxu0 0.0
        %1570 = vmatprep.subr.mxu0 0.0
        %1571 = vmatpush2.msra.mxu0 0.0
        %1572 = vmatprep.subr.mxu0 0.0
        %1573 = vmatpush2.msra.mxu0 0.0
        %1574 = vmatprep.subr.mxu0 0.0
        %1575 = vmatpush2.msra.mxu0 0.0
        %1576 = vmatprep.subr.mxu0 0.0
        %1577 = vmatpush2.msra.mxu0 0.0
        %1578 = vmatprep.subr.mxu0 0.0
        %1579 = vmatpush2.msra.mxu0 0.0
        %1580 = vmatprep.subr.mxu0 0.0
        %1581 = vmatpush2.msra.mxu0 0.0
        %1582 = vmatprep.subr.mxu0 0.0
        %1583 = vmatpush2.msra.mxu0 0.0
        %1584 = vmatprep.subr.mxu0 0.0
        %1585 = vmatpush2.msra.mxu0 0.0
        %1586 = vmatprep.subr.mxu0 0.0
        %1587 = vmatpush2.msra.mxu0 0.0
        %1588 = vmatprep.subr.mxu0 0.0
        %1589 = vmatpush2.msra.mxu0 0.0
        %1590 = vmatprep.subr.mxu0 0.0
        %1591 = vmatpush2.msra.mxu0 0.0
        %1592 = vmatprep.subr.mxu0 0.0
        %1593 = vmatpush2.msra.mxu0 0.0
        %1594 = vmatprep.mubr.f32.mxu0 0.0
        %1595 = vmatmul.mubr.f32.gmra.mxu0 %v1528
        %v1596 = vpop.f32.mrf.mxu0
        %v1597 = vadd.f32 0.0, %v1596
        %v1598 = vpop.f32.mrf.mxu0
        %1599 = vdwg.mxu0
        %v1600 = vsel %vm1121, %v1213, 0
        %1602 = vmatprep.subr.mxu0 0.0
        %1603 = vmatpush1.msra.mxu0 0.0
        %1604 = vmatprep.subr.mxu0 0.0
        %1605 = vmatpush1.msra.mxu0 0.0
        %1606 = vmatprep.subr.mxu0 0.0
        %1607 = vmatpush1.msra.mxu0 0.0
        %1608 = vmatprep.subr.mxu0 0.0
        %1609 = vmatpush1.msra.mxu0 0.0
        %1610 = vmatprep.subr.mxu0 0.0
        %1611 = vmatpush1.msra.mxu0 0.0
        %1612 = vmatprep.subr.mxu0 0.0
        %1613 = vmatpush1.msra.mxu0 0.0
        %1614 = vmatprep.subr.mxu0 0.0
        %1615 = vmatpush1.msra.mxu0 0.0
        %1616 = vmatprep.subr.mxu0 0.0
        %1617 = vmatpush1.msra.mxu0 0.0
        %1618 = vmatprep.subr.mxu0 0.0
        %1619 = vmatpush1.msra.mxu0 0.0
        %1620 = vmatprep.subr.mxu0 0.0
        %1621 = vmatpush1.msra.mxu0 0.0
        %1622 = vmatprep.subr.mxu0 0.0
        %1623 = vmatpush1.msra.mxu0 0.0
        %1624 = vmatprep.subr.mxu0 0.0
        %1625 = vmatpush1.msra.mxu0 0.0
        %1626 = vmatprep.subr.mxu0 0.0
        %1627 = vmatpush1.msra.mxu0 0.0
        %1628 = vmatprep.subr.mxu0 0.0
        %1629 = vmatpush1.msra.mxu0 0.0
        %1630 = vmatprep.subr.mxu0 0.0
        %1631 = vmatpush1.msra.mxu0 0.0
        %1632 = vmatprep.subr.mxu0 0.0
        %1633 = vmatpush1.msra.mxu0 %v322
        %1634 = vmatprep.subr.mxu0 0.0
        %1635 = vmatpush2.msra.mxu0 0.0
        %1636 = vmatprep.subr.mxu0 0.0
        %1637 = vmatpush2.msra.mxu0 0.0
        %1638 = vmatprep.subr.mxu0 0.0
        %1639 = vmatpush2.msra.mxu0 0.0
        %1640 = vmatprep.subr.mxu0 0.0
        %1641 = vmatpush2.msra.mxu0 0.0
        %1642 = vmatprep.subr.mxu0 0.0
        %1643 = vmatpush2.msra.mxu0 0.0
        %1644 = vmatprep.subr.mxu0 0.0
        %1645 = vmatpush2.msra.mxu0 0.0
        %1646 = vmatprep.subr.mxu0 0.0
        %1647 = vmatpush2.msra.mxu0 0.0
        %1648 = vmatprep.subr.mxu0 0.0
        %1649 = vmatpush2.msra.mxu0 0.0
        %1650 = vmatprep.subr.mxu0 0.0
        %1651 = vmatpush2.msra.mxu0 0.0
        %1652 = vmatprep.subr.mxu0 0.0
        %1653 = vmatpush2.msra.mxu0 0.0
        %1654 = vmatprep.subr.mxu0 0.0
        %1655 = vmatpush2.msra.mxu0 0.0
        %1656 = vmatprep.subr.mxu0 0.0
        %1657 = vmatpush2.msra.mxu0 0.0
        %1658 = vmatprep.subr.mxu0 0.0
        %1659 = vmatpush2.msra.mxu0 0.0
        %1660 = vmatprep.subr.mxu0 0.0
        %1661 = vmatpush2.msra.mxu0 0.0
        %1662 = vmatprep.subr.mxu0 0.0
        %1663 = vmatpush2.msra.mxu0 0.0
        %1664 = vmatprep.subr.mxu0 0.0
        %1665 = vmatpush2.msra.mxu0 0.0
        %1666 = vmatprep.mubr.f32.mxu0 0.0
        %1667 = vmatmul.mubr.f32.gmra.mxu0 %v1600
        %v1668 = vpop.f32.mrf.mxu0
        %v1669 = vadd.f32 0.0, %v1668
        %v1670 = vpop.f32.mrf.mxu0
        %1671 = vdwg.mxu0
        %v1672 = vsel %vm1121, %v1214, 0
        %1674 = vmatprep.subr.mxu0 0.0
        %1675 = vmatpush1.msra.mxu0 0.0
        %1676 = vmatprep.subr.mxu0 0.0
        %1677 = vmatpush1.msra.mxu0 0.0
        %1678 = vmatprep.subr.mxu0 0.0
        %1679 = vmatpush1.msra.mxu0 0.0
        %1680 = vmatprep.subr.mxu0 0.0
        %1681 = vmatpush1.msra.mxu0 0.0
        %1682 = vmatprep.subr.mxu0 0.0
        %1683 = vmatpush1.msra.mxu0 0.0
        %1684 = vmatprep.subr.mxu0 0.0
        %1685 = vmatpush1.msra.mxu0 0.0
        %1686 = vmatprep.subr.mxu0 0.0
        %1687 = vmatpush1.msra.mxu0 0.0
        %1688 = vmatprep.subr.mxu0 0.0
        %1689 = vmatpush1.msra.mxu0 0.0
        %1690 = vmatprep.subr.mxu0 0.0
        %1691 = vmatpush1.msra.mxu0 0.0
        %1692 = vmatprep.subr.mxu0 0.0
        %1693 = vmatpush1.msra.mxu0 0.0
        %1694 = vmatprep.subr.mxu0 0.0
        %1695 = vmatpush1.msra.mxu0 0.0
        %1696 = vmatprep.subr.mxu0 0.0
        %1697 = vmatpush1.msra.mxu0 0.0
        %1698 = vmatprep.subr.mxu0 0.0
        %1699 = vmatpush1.msra.mxu0 0.0
        %1700 = vmatprep.subr.mxu0 0.0
        %1701 = vmatpush1.msra.mxu0 0.0
        %1702 = vmatprep.subr.mxu0 0.0
        %1703 = vmatpush1.msra.mxu0 0.0
        %1704 = vmatprep.subr.mxu0 0.0
        %1705 = vmatpush1.msra.mxu0 %v323
        %1706 = vmatprep.subr.mxu0 0.0
        %1707 = vmatpush2.msra.mxu0 0.0
        %1708 = vmatprep.subr.mxu0 0.0
        %1709 = vmatpush2.msra.mxu0 0.0
        %1710 = vmatprep.subr.mxu0 0.0
        %1711 = vmatpush2.msra.mxu0 0.0
        %1712 = vmatprep.subr.mxu0 0.0
        %1713 = vmatpush2.msra.mxu0 0.0
        %1714 = vmatprep.subr.mxu0 0.0
        %1715 = vmatpush2.msra.mxu0 0.0
        %1716 = vmatprep.subr.mxu0 0.0
        %1717 = vmatpush2.msra.mxu0 0.0
        %1718 = vmatprep.subr.mxu0 0.0
        %1719 = vmatpush2.msra.mxu0 0.0
        %1720 = vmatprep.subr.mxu0 0.0
        %1721 = vmatpush2.msra.mxu0 0.0
        %1722 = vmatprep.subr.mxu0 0.0
        %1723 = vmatpush2.msra.mxu0 0.0
        %1724 = vmatprep.subr.mxu0 0.0
        %1725 = vmatpush2.msra.mxu0 0.0
        %1726 = vmatprep.subr.mxu0 0.0
        %1727 = vmatpush2.msra.mxu0 0.0
        %1728 = vmatprep.subr.mxu0 0.0
        %1729 = vmatpush2.msra.mxu0 0.0
        %1730 = vmatprep.subr.mxu0 0.0
        %1731 = vmatpush2.msra.mxu0 0.0
        %1732 = vmatprep.subr.mxu0 0.0
        %1733 = vmatpush2.msra.mxu0 0.0
        %1734 = vmatprep.subr.mxu0 0.0
        %1735 = vmatpush2.msra.mxu0 0.0
        %1736 = vmatprep.subr.mxu0 0.0
        %1737 = vmatpush2.msra.mxu0 0.0
        %1738 = vmatprep.mubr.f32.mxu0 0.0
        %1739 = vmatmul.mubr.f32.gmra.mxu0 %v1672
        %v1740 = vpop.f32.mrf.mxu0
        %v1741 = vadd.f32 0.0, %v1740
        %v1742 = vpop.f32.mrf.mxu0
        %1743 = vdwg.mxu0
        %v1744 = vsel %vm1121, %v1215, 0
        %1746 = vmatprep.subr.mxu0 0.0
        %1747 = vmatpush1.msra.mxu0 0.0
        %1748 = vmatprep.subr.mxu0 0.0
        %1749 = vmatpush1.msra.mxu0 0.0
        %1750 = vmatprep.subr.mxu0 0.0
        %1751 = vmatpush1.msra.mxu0 0.0
        %1752 = vmatprep.subr.mxu0 0.0
        %1753 = vmatpush1.msra.mxu0 0.0
        %1754 = vmatprep.subr.mxu0 0.0
        %1755 = vmatpush1.msra.mxu0 0.0
        %1756 = vmatprep.subr.mxu0 0.0
        %1757 = vmatpush1.msra.mxu0 0.0
        %1758 = vmatprep.subr.mxu0 0.0
        %1759 = vmatpush1.msra.mxu0 0.0
        %1760 = vmatprep.subr.mxu0 0.0
        %1761 = vmatpush1.msra.mxu0 0.0
        %1762 = vmatprep.subr.mxu0 0.0
        %1763 = vmatpush1.msra.mxu0 0.0
        %1764 = vmatprep.subr.mxu0 0.0
        %1765 = vmatpush1.msra.mxu0 0.0
        %1766 = vmatprep.subr.mxu0 0.0
        %1767 = vmatpush1.msra.mxu0 0.0
        %1768 = vmatprep.subr.mxu0 0.0
        %1769 = vmatpush1.msra.mxu0 0.0
        %1770 = vmatprep.subr.mxu0 0.0
        %1771 = vmatpush1.msra.mxu0 0.0
        %1772 = vmatprep.subr.mxu0 0.0
        %1773 = vmatpush1.msra.mxu0 0.0
        %1774 = vmatprep.subr.mxu0 0.0
        %1775 = vmatpush1.msra.mxu0 0.0
        %1776 = vmatprep.subr.mxu0 0.0
        %1777 = vmatpush1.msra.mxu0 %v324
        %1778 = vmatprep.subr.mxu0 0.0
        %1779 = vmatpush2.msra.mxu0 0.0
        %1780 = vmatprep.subr.mxu0 0.0
        %1781 = vmatpush2.msra.mxu0 0.0
        %1782 = vmatprep.subr.mxu0 0.0
        %1783 = vmatpush2.msra.mxu0 0.0
        %1784 = vmatprep.subr.mxu0 0.0
        %1785 = vmatpush2.msra.mxu0 0.0
        %1786 = vmatprep.subr.mxu0 0.0
        %1787 = vmatpush2.msra.mxu0 0.0
        %1788 = vmatprep.subr.mxu0 0.0
        %1789 = vmatpush2.msra.mxu0 0.0
        %1790 = vmatprep.subr.mxu0 0.0
        %1791 = vmatpush2.msra.mxu0 0.0
        %1792 = vmatprep.subr.mxu0 0.0
        %1793 = vmatpush2.msra.mxu0 0.0
        %1794 = vmatprep.subr.mxu0 0.0
        %1795 = vmatpush2.msra.mxu0 0.0
        %1796 = vmatprep.subr.mxu0 0.0
        %1797 = vmatpush2.msra.mxu0 0.0
        %1798 = vmatprep.subr.mxu0 0.0
        %1799 = vmatpush2.msra.mxu0 0.0
        %1800 = vmatprep.subr.mxu0 0.0
        %1801 = vmatpush2.msra.mxu0 0.0
        %1802 = vmatprep.subr.mxu0 0.0
        %1803 = vmatpush2.msra.mxu0 0.0
        %1804 = vmatprep.subr.mxu0 0.0
        %1805 = vmatpush2.msra.mxu0 0.0
        %1806 = vmatprep.subr.mxu0 0.0
        %1807 = vmatpush2.msra.mxu0 0.0
        %1808 = vmatprep.subr.mxu0 0.0
        %1809 = vmatpush2.msra.mxu0 0.0
        %1810 = vmatprep.mubr.f32.mxu0 0.0
        %1811 = vmatmul.mubr.f32.gmra.mxu0 %v1744
        %v1812 = vpop.f32.mrf.mxu0
        %v1813 = vadd.f32 0.0, %v1812
        %v1814 = vpop.f32.mrf.mxu0
        %1815 = vdwg.mxu0
        %v1824 = vrot.slane %v1381, 7
        %v1825 = vsel %vm1100, %v1824, %v1309
        %v1826 = vrot.slane %v1453, 6
        %v1827 = vsel %vm1103, %v1826, %v1825
        %v1828 = vrot.slane %v1525, 5
        %v1829 = vsel %vm1106, %v1828, %v1827
        %v1830 = vrot.slane %v1597, 4
        %v1831 = vsel %vm1109, %v1830, %v1829
        %v1832 = vrot.slane %v1669, 3
        %v1833 = vsel %vm1112, %v1832, %v1831
        %v1834 = vrot.slane %v1741, 2
        %v1835 = vsel %vm1115, %v1834, %v1833
        %v1836 = vrot.slane %v1813, 1
        %v1837 = vsel %vm1118, %v1836, %v1835
        %1839 = vst.msk [vmem:[#allocation2] sm:$0xff] %vm466, %v1837
        %1840 = vrot.lane.b32.xlu0 %v316, 64
        %v1841 = vpop.permute.xlu0 %1840
        %vm1843 = vcmask 785920
        %1844 = vst.msk [vmem:[#allocation2] sm:$0xff] %vm1843, %v1841
        %v1845 = vld [vmem:[#allocation2] sm:$0xff]
        %vm1846 = vcmask 785408
        %v1848 = vsel %vm1846, %v1845, 0
        %1850 = vmatprep.subr.mxu0 0.0
        %1851 = vmatpush1.msra.mxu0 0.0
        %1852 = vmatprep.subr.mxu0 0.0
        %1853 = vmatpush1.msra.mxu0 0.0
        %1854 = vmatprep.subr.mxu0 0.0
        %1855 = vmatpush1.msra.mxu0 0.0
        %1856 = vmatprep.subr.mxu0 0.0
        %1857 = vmatpush1.msra.mxu0 0.0
        %1858 = vmatprep.subr.mxu0 0.0
        %1859 = vmatpush1.msra.mxu0 %v341
        %1860 = vmatprep.subr.mxu0 0.0
        %1861 = vmatpush1.msra.mxu0 %v340
        %1862 = vmatprep.subr.mxu0 0.0
        %1863 = vmatpush1.msra.mxu0 %v339
        %1864 = vmatprep.subr.mxu0 0.0
        %1865 = vmatpush1.msra.mxu0 %v338
        %1866 = vmatprep.subr.mxu0 0.0
        %1867 = vmatpush1.msra.mxu0 %v337
        %1868 = vmatprep.subr.mxu0 0.0
        %1869 = vmatpush1.msra.mxu0 %v336
        %1870 = vmatprep.subr.mxu0 0.0
        %1871 = vmatpush1.msra.mxu0 %v335
        %1872 = vmatprep.subr.mxu0 0.0
        %1873 = vmatpush1.msra.mxu0 %v334
        %1874 = vmatprep.subr.mxu0 0.0
        %1875 = vmatpush1.msra.mxu0 %v333
        %1876 = vmatprep.subr.mxu0 0.0
        %1877 = vmatpush1.msra.mxu0 %v332
        %1878 = vmatprep.subr.mxu0 0.0
        %1879 = vmatpush1.msra.mxu0 %v331
        %1880 = vmatprep.subr.mxu0 0.0
        %1881 = vmatpush1.msra.mxu0 %v330
        %1882 = vmatprep.subr.mxu0 0.0
        %1883 = vmatpush2.msra.mxu0 0.0
        %1884 = vmatprep.subr.mxu0 0.0
        %1885 = vmatpush2.msra.mxu0 0.0
        %1886 = vmatprep.subr.mxu0 0.0
        %1887 = vmatpush2.msra.mxu0 0.0
        %1888 = vmatprep.subr.mxu0 0.0
        %1889 = vmatpush2.msra.mxu0 0.0
        %1890 = vmatprep.subr.mxu0 0.0
        %1891 = vmatpush2.msra.mxu0 0.0
        %1892 = vmatprep.subr.mxu0 0.0
        %1893 = vmatpush2.msra.mxu0 0.0
        %1894 = vmatprep.subr.mxu0 0.0
        %1895 = vmatpush2.msra.mxu0 0.0
        %1896 = vmatprep.subr.mxu0 0.0
        %1897 = vmatpush2.msra.mxu0 0.0
        %1898 = vmatprep.subr.mxu0 0.0
        %1899 = vmatpush2.msra.mxu0 0.0
        %1900 = vmatprep.subr.mxu0 0.0
        %1901 = vmatpush2.msra.mxu0 0.0
        %1902 = vmatprep.subr.mxu0 0.0
        %1903 = vmatpush2.msra.mxu0 0.0
        %1904 = vmatprep.subr.mxu0 0.0
        %1905 = vmatpush2.msra.mxu0 0.0
        %1906 = vmatprep.subr.mxu0 0.0
        %1907 = vmatpush2.msra.mxu0 0.0
        %1908 = vmatprep.subr.mxu0 0.0
        %1909 = vmatpush2.msra.mxu0 0.0
        %1910 = vmatprep.subr.mxu0 0.0
        %1911 = vmatpush2.msra.mxu0 0.0
        %1912 = vmatprep.subr.mxu0 0.0
        %1913 = vmatpush2.msra.mxu0 0.0
        %1914 = vmatprep.mubr.f32.mxu0 0.0
        %1915 = vmatmul.mubr.f32.gmra.mxu0 %v1848
        %v1916 = vpop.f32.mrf.mxu0
        %v1917 = vadd.f32 0.0, %v1916
        %v1918 = vpop.f32.mrf.mxu0
        %1919 = vdwg.mxu0
        %v1920 = vtanh.pop %v1917
        %1921 = vst.msk [vmem:[%s296] sm:$0xff] %vm342, %v1920
        %s1922 = sand.u32 %s152, 1
        %s1923 = scalar_lea.sflag [#allocation5], %s1922
        %s1924 = sand.u32 %s152, 1
        %s1925 = smul.addr %s1924, 8
        %s1926 = scalar_lea.vmem [#allocation6], %s1925
        %p1927 = scmp.lt.s32.totalorder %s24, 3
        %s1928 = scalar_select %p1927, %s24, 3
        %s1929 = smul.addr %s1928, 8
        %s1930 = scalar_lea.vmem %s6, %s1929
        // Predicated region
        $region45: #{tpu_custom_call.1} parent=39 // pred_check
          %p1931 = pneg %p162
        $region46: #{tpu_custom_call.1} parent=39 // pred_check_branch
          %1933 = sbr.rel (%p1931) target = $region48
        $region47: #{tpu_custom_call.1} parent=39 // pred_region
          %s1935 = ssub.s32 128, 128
          %1936 = vsyncadd %s1923, %s1935
          %s1937 = smul.addr %s24, 128
          %s1938 = scalar_lea.hbm %s5, %s1937
          %s1940 = sshll.u32 %s1926, 4
          %s1941 = int_to_ptr.vmem [resolvable:$true] %s1940
          %1943 = dma.vmem_to_hbm [thread:$0]  %s1941, 128, %s1938, %s1923
        $region48: #{tpu_custom_call.1} parent=39 // pred_fallthru
          _
        // Predicated region
        $region49: #{tpu_custom_call.1} parent=39 // pred_check
          %p1944 = pneg %p188
        $region50: #{tpu_custom_call.1} parent=39 // pred_check_branch
          %1946 = sbr.rel (%p1944) target = $region52
        $region51: #{tpu_custom_call.1} parent=39 // pred_region
          _
        $region52: #{tpu_custom_call.1} parent=39 // pred_fallthru
          _
      $region40: #{tpu_custom_call.1} parent=5 // pred_fallthru
        _
      %p1947 = scmp.le.s32.totalorder 2, %s19
      // Predicated region
      $region53: #{tpu_custom_call.1} parent=5 // pred_check
        %p1948 = pneg %p1947
      $region54: #{tpu_custom_call.1} parent=5 // pred_check_branch
        %1950 = sbr.rel (%p1948) target = $region56
      $region55: #{tpu_custom_call.1} parent=5 // pred_region
        %s1951 = ssub.s32 %s19, 2
        // Predicated region
        $region57: #{tpu_custom_call.1} parent=55 // pred_check
          %p1952 = pneg %p168
        $region58: #{tpu_custom_call.1} parent=55 // pred_check_branch
          %1954 = sbr.rel (%p1952) target = $region60
        $region59: #{tpu_custom_call.1} parent=55 // pred_region
          %s1955 = sand.u32 %s153, 1
          %s1956 = scalar_lea.sflag [#allocation5], %s1955
          %s1957 = sand.u32 %s153, 1
          %s1958 = smul.addr %s1957, 8
          %s1959 = scalar_lea.vmem [#allocation6], %s1958
          %1960 = dma.done %s1956, 128
        $region60: #{tpu_custom_call.1} parent=55 // pred_fallthru
          _
        // Predicated region
        $region61: #{tpu_custom_call.1} parent=55 // pred_check
          %p1961 = pneg %p194
        $region62: #{tpu_custom_call.1} parent=55 // pred_check_branch
          %1963 = sbr.rel (%p1961) target = $region64
        $region63: #{tpu_custom_call.1} parent=55 // pred_region
          %p1964 = scmp.lt.s32.totalorder %s25, 3
          %s1965 = scalar_select %p1964, %s25, 3
          %s1966 = smul.addr %s1965, 8
          %s1967 = scalar_lea.vmem %s6, %s1966
        $region64: #{tpu_custom_call.1} parent=55 // pred_fallthru
          _
      $region56: #{tpu_custom_call.1} parent=5 // pred_fallthru
        _
    $region6: #{tpu_custom_call.1} parent=1 // loop_footer
      %s23 = sadd.s32 1, %s19
    $region7: #{tpu_custom_call.1} parent=1 // loop_footer_branch
      %18 = sbr.rel target = $region3
    $region8: #{tpu_custom_call.1} parent=1 // loop_exit
      _
    %1968 = vsyncpa [#allocation4], 1
    %s1969 = scalar_lea.sflag [#allocation4], 1
    %1970 = vsyncpa %s1969, 1
    %1971 = vsyncpa [#allocation5], 1
    %s1972 = scalar_lea.sflag [#allocation5], 1
    %1973 = vsyncpa %s1972, 1

</llo_original>
